<compile_context>
chip_gen: v7x
topology: tpu7x:2x2x1
jax: 0.10.0
libtpu: 0.0.40
codegen_flags: <defaults>
</compile_context>

<pallas_src>
import jax
import jax.numpy as jnp
from jax.experimental import pallas as pl
from jax.experimental.pallas import tpu as pltpu


def gru_policy_kernel(x_ref, h0_ref, wih_ref, whh_ref, bx_ref, bhn_ref,
                      wpol_ref, bpol_ref,
                      logits_ref, hout_ref):
    TB, _ = x_ref.shape          # (T*B, I)
    B, H = h0_ref.shape          # (B, H)
    T = TB // B

    # Phase 1: batched input projection for all timesteps (off the serial
    # critical path).  bx already contains b_ih (and b_hh for the r/z gates).
    gx_all = jnp.dot(x_ref[...], wih_ref[...],
                     preferred_element_type=jnp.float32) + bx_ref[...]   # (T*B, 3H)

    whh = whh_ref[...]           # (H, 3H)
    bhn = bhn_ref[...]           # (1, H)
    h = h0_ref[...]              # (B, H)

    # Phase 2: serial recurrence, fully unrolled (T is small and static).
    # Per step: one (B,H)@(H,3H) MXU matmul + gate nonlinearities.
    hs = []
    for t in range(T):
        gx = gx_all[t * B:(t + 1) * B]                                    # (B, 3H)
        gh = jnp.dot(h, whh, preferred_element_type=jnp.float32)          # (B, 3H)
        r = jax.nn.sigmoid(gx[:, 0:H] + gh[:, 0:H])
        z = jax.nn.sigmoid(gx[:, H:2 * H] + gh[:, H:2 * H])
        n = jnp.tanh(gx[:, 2 * H:] + r * (gh[:, 2 * H:] + bhn))
        h = (1.0 - z) * n + z * h
        hs.append(h)

    # Phase 3: batched ReLU + policy head over all timesteps, then one dense
    # writeback of the logits and one writeback of the final hidden state.
    h_all = jnp.concatenate(hs, axis=0)                                   # (T*B, H)
    relu_h = jnp.maximum(h_all, 0.0)
    logits = jnp.dot(relu_h, wpol_ref[...],
                     preferred_element_type=jnp.float32) + bpol_ref[...]  # (T*B, O)

    logits_ref[...] = logits.astype(logits_ref.dtype)
    hout_ref[...] = h.astype(hout_ref.dtype)


def gru_policy_forward(x, h0, w_ih, w_hh, b_ih, b_hh, w_pol, b_pol):
    """x: (T, B, I), h0: (1, B, H). Returns (logits (T, B, O), h_out (1, B, H))."""
    T, B, I = x.shape
    H = h0.shape[-1]
    O = w_pol.shape[0]

    # Wrapper-side layout plumbing (free XLA ops, outside the kernel):
    x2 = x.reshape(T * B, I)                  # all timesteps as one matmul operand
    h0_2 = h0.reshape(B, H)
    w_ih_t = jnp.transpose(w_ih)              # (I, 3H)
    w_hh_t = jnp.transpose(w_hh)              # (H, 3H)
    w_pol_t = jnp.transpose(w_pol)            # (H, O)
    # Fold b_hh's r/z parts into the hoisted input-projection bias; keep the
    # n-gate hidden bias separate (it sits inside r * (...)).
    bx = jnp.concatenate([b_ih[:2 * H] + b_hh[:2 * H], b_ih[2 * H:]]).reshape(1, 3 * H)
    bhn = b_hh[2 * H:].reshape(1, H)
    b_pol2 = b_pol.reshape(1, O)

    vmem = pl.BlockSpec(memory_space=pltpu.MemorySpace.VMEM)   # whole array resident

    logits2, h_last = pl.pallas_call(
        gru_policy_kernel,
        out_shape=(
            jax.ShapeDtypeStruct((T * B, O), jnp.float32),
            jax.ShapeDtypeStruct((B, H), jnp.float32),
        ),
        in_specs=[vmem] * 8,
        out_specs=(vmem, vmem),
    )(x2, h0_2, w_ih_t, w_hh_t, bx, bhn, w_pol_t, b_pol2)

    return logits2.reshape(T, B, O), h_last.reshape(1, B, H)


def gru_policy_reference(x, h0, w_ih, w_hh, b_ih, b_hh, w_pol, b_pol):
    """Pure-JAX reference mirroring PyTorch nn.GRU + ReLU + Linear."""
    T, B, I = x.shape
    H = h0.shape[-1]

    def cell(h, x_t):
        gx = x_t @ w_ih.T + b_ih
        gh = h @ w_hh.T + b_hh
        r = jax.nn.sigmoid(gx[:, :H] + gh[:, :H])
        z = jax.nn.sigmoid(gx[:, H:2 * H] + gh[:, H:2 * H])
        n = jnp.tanh(gx[:, 2 * H:] + r * gh[:, 2 * H:])
        h_new = (1.0 - z) * n + z * h
        return h_new, h_new

    h_last, hs = jax.lax.scan(cell, h0[0], x)
    relu_h = jnp.maximum(hs, 0.0)
    logits = relu_h @ w_pol.T + b_pol
    return logits, h_last[None]


if __name__ == "__main__":
    # Small shapes consistent with the module: seq=8, batch=4, input=16,
    # hidden=32, output_size=6.
    T, B, I, H, O = 8, 4, 16, 32, 6

    key = jax.random.PRNGKey(0)
    ks = jax.random.split(key, 8)
    bound = 1.0 / jnp.sqrt(H)

    x = jax.random.normal(ks[0], (T, B, I), dtype=jnp.float32)
    h0 = jnp.zeros((1, B, H), dtype=jnp.float32)          # init_hidden_state

    w_ih = jax.random.uniform(ks[1], (3 * H, I), jnp.float32, -bound, bound)
    w_hh = jax.random.uniform(ks[2], (3 * H, H), jnp.float32, -bound, bound)
    b_ih = jax.random.uniform(ks[3], (3 * H,), jnp.float32, -bound, bound)
    b_hh = jax.random.uniform(ks[4], (3 * H,), jnp.float32, -bound, bound)
    w_pol = jax.random.uniform(ks[5], (O, H), jnp.float32, -bound, bound)
    b_pol = jax.random.uniform(ks[6], (O,), jnp.float32, -bound, bound)

    logits, h_out = gru_policy_forward(x, h0, w_ih, w_hh, b_ih, b_hh, w_pol, b_pol)
    logits = jax.block_until_ready(logits)
    h_out = jax.block_until_ready(h_out)

    ref_logits, ref_h = gru_policy_reference(x, h0, w_ih, w_hh, b_ih, b_hh, w_pol, b_pol)
    assert jnp.allclose(logits, ref_logits, atol=1e-5, rtol=1e-5)
    assert jnp.allclose(h_out, ref_h, atol=1e-5, rtol=1e-5)

    print("KERNEL_OK")
</pallas_src>

<mosaic_0001>
module attributes {stable_mosaic.version = 11 : i64} {
  func.func @gru_policy_kernel(%arg0: memref<32x16xf32, #tpu.memory_space<vmem>>, %arg1: memref<4x32xf32, #tpu.memory_space<vmem>>, %arg2: memref<16x96xf32, #tpu.memory_space<vmem>>, %arg3: memref<32x96xf32, #tpu.memory_space<vmem>>, %arg4: memref<1x96xf32, #tpu.memory_space<vmem>>, %arg5: memref<1x32xf32, #tpu.memory_space<vmem>>, %arg6: memref<32x6xf32, #tpu.memory_space<vmem>>, %arg7: memref<1x6xf32, #tpu.memory_space<vmem>>, %arg8: memref<32x6xf32, #tpu.memory_space<vmem>>, %arg9: memref<4x32xf32, #tpu.memory_space<vmem>>) attributes {dimension_semantics = [], scalar_prefetch = 0 : i64, scratch_operands = 0 : i64, tpu.core_type = #tpu.core_type<tc>} {
    %c0 = arith.constant 0 : index
    %c0_0 = arith.constant 0 : index
    %0 = vector.load %arg0[%c0, %c0_0] : memref<32x16xf32, #tpu.memory_space<vmem>>, vector<32x16xf32>
    %c0_1 = arith.constant 0 : index
    %c0_2 = arith.constant 0 : index
    %1 = vector.load %arg2[%c0_1, %c0_2] : memref<16x96xf32, #tpu.memory_space<vmem>>, vector<16x96xf32>
    %cst = arith.constant dense<0.000000e+00> : vector<32x96xf32>
    %2 = tpu.matmul %0, %1, %cst {dimension_numbers = #tpu.dot_dimension_numbers<[1], [0], [0], [1], [0, 0, 1, 1], [], []>} : vector<32x16xf32>, vector<16x96xf32>, vector<32x96xf32> -> vector<32x96xf32>
    %c0_3 = arith.constant 0 : index
    %c0_4 = arith.constant 0 : index
    %3 = vector.load %arg4[%c0_3, %c0_4] : memref<1x96xf32, #tpu.memory_space<vmem>>, vector<1x96xf32>
    %4 = vector.broadcast %3 : vector<1x96xf32> to vector<32x96xf32>
    %5 = arith.addf %2, %4 : vector<32x96xf32>
    %c0_5 = arith.constant 0 : index
    %c0_6 = arith.constant 0 : index
    %6 = vector.load %arg3[%c0_5, %c0_6] : memref<32x96xf32, #tpu.memory_space<vmem>>, vector<32x96xf32>
    %c0_7 = arith.constant 0 : index
    %c0_8 = arith.constant 0 : index
    %7 = vector.load %arg5[%c0_7, %c0_8] : memref<1x32xf32, #tpu.memory_space<vmem>>, vector<1x32xf32>
    %c0_9 = arith.constant 0 : index
    %c0_10 = arith.constant 0 : index
    %8 = vector.load %arg1[%c0_9, %c0_10] : memref<4x32xf32, #tpu.memory_space<vmem>>, vector<4x32xf32>
    %9 = vector.extract_strided_slice %5 {offsets = [0, 0], sizes = [4, 96], strides = [1, 1]} : vector<32x96xf32> to vector<4x96xf32>
    %cst_11 = arith.constant dense<0.000000e+00> : vector<4x96xf32>
    %10 = tpu.matmul %8, %6, %cst_11 {dimension_numbers = #tpu.dot_dimension_numbers<[1], [0], [0], [1], [0, 0, 1, 1], [], []>} : vector<4x32xf32>, vector<32x96xf32>, vector<4x96xf32> -> vector<4x96xf32>
    %11 = vector.extract_strided_slice %9 {offsets = [0, 0], sizes = [4, 32], strides = [1, 1]} : vector<4x96xf32> to vector<4x32xf32>
    %12 = vector.extract_strided_slice %10 {offsets = [0, 0], sizes = [4, 32], strides = [1, 1]} : vector<4x96xf32> to vector<4x32xf32>
    %13 = arith.addf %11, %12 : vector<4x32xf32>
    %14 = arith.negf %13 : vector<4x32xf32>
    %15 = math.exp %14 : vector<4x32xf32>
    %cst_12 = arith.constant 1.000000e+00 : f32
    %16 = vector.broadcast %cst_12 : f32 to vector<4x32xf32>
    %17 = arith.addf %16, %15 : vector<4x32xf32>
    %18 = arith.divf %16, %17 : vector<4x32xf32>
    %19 = vector.extract_strided_slice %9 {offsets = [0, 32], sizes = [4, 32], strides = [1, 1]} : vector<4x96xf32> to vector<4x32xf32>
    %20 = vector.extract_strided_slice %10 {offsets = [0, 32], sizes = [4, 32], strides = [1, 1]} : vector<4x96xf32> to vector<4x32xf32>
    %21 = arith.addf %19, %20 : vector<4x32xf32>
    %22 = arith.negf %21 : vector<4x32xf32>
    %23 = math.exp %22 : vector<4x32xf32>
    %cst_13 = arith.constant 1.000000e+00 : f32
    %24 = vector.broadcast %cst_13 : f32 to vector<4x32xf32>
    %25 = arith.addf %24, %23 : vector<4x32xf32>
    %26 = arith.divf %24, %25 : vector<4x32xf32>
    %27 = vector.extract_strided_slice %9 {offsets = [0, 64], sizes = [4, 32], strides = [1, 1]} : vector<4x96xf32> to vector<4x32xf32>
    %28 = vector.extract_strided_slice %10 {offsets = [0, 64], sizes = [4, 32], strides = [1, 1]} : vector<4x96xf32> to vector<4x32xf32>
    %29 = vector.broadcast %7 : vector<1x32xf32> to vector<4x32xf32>
    %30 = arith.addf %28, %29 : vector<4x32xf32>
    %31 = arith.mulf %18, %30 : vector<4x32xf32>
    %32 = arith.addf %27, %31 : vector<4x32xf32>
    %33 = math.tanh %32 : vector<4x32xf32>
    %cst_14 = arith.constant 1.000000e+00 : f32
    %34 = vector.broadcast %cst_14 : f32 to vector<4x32xf32>
    %35 = arith.subf %34, %26 : vector<4x32xf32>
    %36 = arith.mulf %35, %33 : vector<4x32xf32>
    %37 = arith.mulf %26, %8 : vector<4x32xf32>
    %38 = arith.addf %36, %37 : vector<4x32xf32>
    %39 = vector.extract_strided_slice %5 {offsets = [4, 0], sizes = [4, 96], strides = [1, 1]} : vector<32x96xf32> to vector<4x96xf32>
    %cst_15 = arith.constant dense<0.000000e+00> : vector<4x96xf32>
    %40 = tpu.matmul %38, %6, %cst_15 {dimension_numbers = #tpu.dot_dimension_numbers<[1], [0], [0], [1], [0, 0, 1, 1], [], []>} : vector<4x32xf32>, vector<32x96xf32>, vector<4x96xf32> -> vector<4x96xf32>
    %41 = vector.extract_strided_slice %39 {offsets = [0, 0], sizes = [4, 32], strides = [1, 1]} : vector<4x96xf32> to vector<4x32xf32>
    %42 = vector.extract_strided_slice %40 {offsets = [0, 0], sizes = [4, 32], strides = [1, 1]} : vector<4x96xf32> to vector<4x32xf32>
    %43 = arith.addf %41, %42 : vector<4x32xf32>
    %44 = arith.negf %43 : vector<4x32xf32>
    %45 = math.exp %44 : vector<4x32xf32>
    %cst_16 = arith.constant 1.000000e+00 : f32
    %46 = vector.broadcast %cst_16 : f32 to vector<4x32xf32>
    %47 = arith.addf %46, %45 : vector<4x32xf32>
    %48 = arith.divf %46, %47 : vector<4x32xf32>
    %49 = vector.extract_strided_slice %39 {offsets = [0, 32], sizes = [4, 32], strides = [1, 1]} : vector<4x96xf32> to vector<4x32xf32>
    %50 = vector.extract_strided_slice %40 {offsets = [0, 32], sizes = [4, 32], strides = [1, 1]} : vector<4x96xf32> to vector<4x32xf32>
    %51 = arith.addf %49, %50 : vector<4x32xf32>
    %52 = arith.negf %51 : vector<4x32xf32>
    %53 = math.exp %52 : vector<4x32xf32>
    %cst_17 = arith.constant 1.000000e+00 : f32
    %54 = vector.broadcast %cst_17 : f32 to vector<4x32xf32>
    %55 = arith.addf %54, %53 : vector<4x32xf32>
    %56 = arith.divf %54, %55 : vector<4x32xf32>
    %57 = vector.extract_strided_slice %39 {offsets = [0, 64], sizes = [4, 32], strides = [1, 1]} : vector<4x96xf32> to vector<4x32xf32>
    %58 = vector.extract_strided_slice %40 {offsets = [0, 64], sizes = [4, 32], strides = [1, 1]} : vector<4x96xf32> to vector<4x32xf32>
    %59 = vector.broadcast %7 : vector<1x32xf32> to vector<4x32xf32>
    %60 = arith.addf %58, %59 : vector<4x32xf32>
    %61 = arith.mulf %48, %60 : vector<4x32xf32>
    %62 = arith.addf %57, %61 : vector<4x32xf32>
    %63 = math.tanh %62 : vector<4x32xf32>
    %cst_18 = arith.constant 1.000000e+00 : f32
    %64 = vector.broadcast %cst_18 : f32 to vector<4x32xf32>
    %65 = arith.subf %64, %56 : vector<4x32xf32>
    %66 = arith.mulf %65, %63 : vector<4x32xf32>
    %67 = arith.mulf %56, %38 : vector<4x32xf32>
    %68 = arith.addf %66, %67 : vector<4x32xf32>
    %69 = vector.extract_strided_slice %5 {offsets = [8, 0], sizes = [4, 96], strides = [1, 1]} : vector<32x96xf32> to vector<4x96xf32>
    %cst_19 = arith.constant dense<0.000000e+00> : vector<4x96xf32>
    %70 = tpu.matmul %68, %6, %cst_19 {dimension_numbers = #tpu.dot_dimension_numbers<[1], [0], [0], [1], [0, 0, 1, 1], [], []>} : vector<4x32xf32>, vector<32x96xf32>, vector<4x96xf32> -> vector<4x96xf32>
    %71 = vector.extract_strided_slice %69 {offsets = [0, 0], sizes = [4, 32], strides = [1, 1]} : vector<4x96xf32> to vector<4x32xf32>
    %72 = vector.extract_strided_slice %70 {offsets = [0, 0], sizes = [4, 32], strides = [1, 1]} : vector<4x96xf32> to vector<4x32xf32>
    %73 = arith.addf %71, %72 : vector<4x32xf32>
    %74 = arith.negf %73 : vector<4x32xf32>
    %75 = math.exp %74 : vector<4x32xf32>
    %cst_20 = arith.constant 1.000000e+00 : f32
    %76 = vector.broadcast %cst_20 : f32 to vector<4x32xf32>
    %77 = arith.addf %76, %75 : vector<4x32xf32>
    %78 = arith.divf %76, %77 : vector<4x32xf32>
    %79 = vector.extract_strided_slice %69 {offsets = [0, 32], sizes = [4, 32], strides = [1, 1]} : vector<4x96xf32> to vector<4x32xf32>
    %80 = vector.extract_strided_slice %70 {offsets = [0, 32], sizes = [4, 32], strides = [1, 1]} : vector<4x96xf32> to vector<4x32xf32>
    %81 = arith.addf %79, %80 : vector<4x32xf32>
    %82 = arith.negf %81 : vector<4x32xf32>
    %83 = math.exp %82 : vector<4x32xf32>
    %cst_21 = arith.constant 1.000000e+00 : f32
    %84 = vector.broadcast %cst_21 : f32 to vector<4x32xf32>
    %85 = arith.addf %84, %83 : vector<4x32xf32>
    %86 = arith.divf %84, %85 : vector<4x32xf32>
    %87 = vector.extract_strided_slice %69 {offsets = [0, 64], sizes = [4, 32], strides = [1, 1]} : vector<4x96xf32> to vector<4x32xf32>
    %88 = vector.extract_strided_slice %70 {offsets = [0, 64], sizes = [4, 32], strides = [1, 1]} : vector<4x96xf32> to vector<4x32xf32>
    %89 = vector.broadcast %7 : vector<1x32xf32> to vector<4x32xf32>
    %90 = arith.addf %88, %89 : vector<4x32xf32>
    %91 = arith.mulf %78, %90 : vector<4x32xf32>
    %92 = arith.addf %87, %91 : vector<4x32xf32>
    %93 = math.tanh %92 : vector<4x32xf32>
    %cst_22 = arith.constant 1.000000e+00 : f32
    %94 = vector.broadcast %cst_22 : f32 to vector<4x32xf32>
    %95 = arith.subf %94, %86 : vector<4x32xf32>
    %96 = arith.mulf %95, %93 : vector<4x32xf32>
    %97 = arith.mulf %86, %68 : vector<4x32xf32>
    %98 = arith.addf %96, %97 : vector<4x32xf32>
    %99 = vector.extract_strided_slice %5 {offsets = [12, 0], sizes = [4, 96], strides = [1, 1]} : vector<32x96xf32> to vector<4x96xf32>
    %cst_23 = arith.constant dense<0.000000e+00> : vector<4x96xf32>
    %100 = tpu.matmul %98, %6, %cst_23 {dimension_numbers = #tpu.dot_dimension_numbers<[1], [0], [0], [1], [0, 0, 1, 1], [], []>} : vector<4x32xf32>, vector<32x96xf32>, vector<4x96xf32> -> vector<4x96xf32>
    %101 = vector.extract_strided_slice %99 {offsets = [0, 0], sizes = [4, 32], strides = [1, 1]} : vector<4x96xf32> to vector<4x32xf32>
    %102 = vector.extract_strided_slice %100 {offsets = [0, 0], sizes = [4, 32], strides = [1, 1]} : vector<4x96xf32> to vector<4x32xf32>
    %103 = arith.addf %101, %102 : vector<4x32xf32>
    %104 = arith.negf %103 : vector<4x32xf32>
    %105 = math.exp %104 : vector<4x32xf32>
    %cst_24 = arith.constant 1.000000e+00 : f32
    %106 = vector.broadcast %cst_24 : f32 to vector<4x32xf32>
    %107 = arith.addf %106, %105 : vector<4x32xf32>
    %108 = arith.divf %106, %107 : vector<4x32xf32>
    %109 = vector.extract_strided_slice %99 {offsets = [0, 32], sizes = [4, 32], strides = [1, 1]} : vector<4x96xf32> to vector<4x32xf32>
    %110 = vector.extract_strided_slice %100 {offsets = [0, 32], sizes = [4, 32], strides = [1, 1]} : vector<4x96xf32> to vector<4x32xf32>
    %111 = arith.addf %109, %110 : vector<4x32xf32>
    %112 = arith.negf %111 : vector<4x32xf32>
    %113 = math.exp %112 : vector<4x32xf32>
    %cst_25 = arith.constant 1.000000e+00 : f32
    %114 = vector.broadcast %cst_25 : f32 to vector<4x32xf32>
    %115 = arith.addf %114, %113 : vector<4x32xf32>
    %116 = arith.divf %114, %115 : vector<4x32xf32>
    %117 = vector.extract_strided_slice %99 {offsets = [0, 64], sizes = [4, 32], strides = [1, 1]} : vector<4x96xf32> to vector<4x32xf32>
    %118 = vector.extract_strided_slice %100 {offsets = [0, 64], sizes = [4, 32], strides = [1, 1]} : vector<4x96xf32> to vector<4x32xf32>
    %119 = vector.broadcast %7 : vector<1x32xf32> to vector<4x32xf32>
    %120 = arith.addf %118, %119 : vector<4x32xf32>
    %121 = arith.mulf %108, %120 : vector<4x32xf32>
    %122 = arith.addf %117, %121 : vector<4x32xf32>
    %123 = math.tanh %122 : vector<4x32xf32>
    %cst_26 = arith.constant 1.000000e+00 : f32
    %124 = vector.broadcast %cst_26 : f32 to vector<4x32xf32>
    %125 = arith.subf %124, %116 : vector<4x32xf32>
    %126 = arith.mulf %125, %123 : vector<4x32xf32>
    %127 = arith.mulf %116, %98 : vector<4x32xf32>
    %128 = arith.addf %126, %127 : vector<4x32xf32>
    %129 = vector.extract_strided_slice %5 {offsets = [16, 0], sizes = [4, 96], strides = [1, 1]} : vector<32x96xf32> to vector<4x96xf32>
    %cst_27 = arith.constant dense<0.000000e+00> : vector<4x96xf32>
    %130 = tpu.matmul %128, %6, %cst_27 {dimension_numbers = #tpu.dot_dimension_numbers<[1], [0], [0], [1], [0, 0, 1, 1], [], []>} : vector<4x32xf32>, vector<32x96xf32>, vector<4x96xf32> -> vector<4x96xf32>
    %131 = vector.extract_strided_slice %129 {offsets = [0, 0], sizes = [4, 32], strides = [1, 1]} : vector<4x96xf32> to vector<4x32xf32>
    %132 = vector.extract_strided_slice %130 {offsets = [0, 0], sizes = [4, 32], strides = [1, 1]} : vector<4x96xf32> to vector<4x32xf32>
    %133 = arith.addf %131, %132 : vector<4x32xf32>
    %134 = arith.negf %133 : vector<4x32xf32>
    %135 = math.exp %134 : vector<4x32xf32>
    %cst_28 = arith.constant 1.000000e+00 : f32
    %136 = vector.broadcast %cst_28 : f32 to vector<4x32xf32>
    %137 = arith.addf %136, %135 : vector<4x32xf32>
    %138 = arith.divf %136, %137 : vector<4x32xf32>
    %139 = vector.extract_strided_slice %129 {offsets = [0, 32], sizes = [4, 32], strides = [1, 1]} : vector<4x96xf32> to vector<4x32xf32>
    %140 = vector.extract_strided_slice %130 {offsets = [0, 32], sizes = [4, 32], strides = [1, 1]} : vector<4x96xf32> to vector<4x32xf32>
    %141 = arith.addf %139, %140 : vector<4x32xf32>
    %142 = arith.negf %141 : vector<4x32xf32>
    %143 = math.exp %142 : vector<4x32xf32>
    %cst_29 = arith.constant 1.000000e+00 : f32
    %144 = vector.broadcast %cst_29 : f32 to vector<4x32xf32>
    %145 = arith.addf %144, %143 : vector<4x32xf32>
    %146 = arith.divf %144, %145 : vector<4x32xf32>
    %147 = vector.extract_strided_slice %129 {offsets = [0, 64], sizes = [4, 32], strides = [1, 1]} : vector<4x96xf32> to vector<4x32xf32>
    %148 = vector.extract_strided_slice %130 {offsets = [0, 64], sizes = [4, 32], strides = [1, 1]} : vector<4x96xf32> to vector<4x32xf32>
    %149 = vector.broadcast %7 : vector<1x32xf32> to vector<4x32xf32>
    %150 = arith.addf %148, %149 : vector<4x32xf32>
    %151 = arith.mulf %138, %150 : vector<4x32xf32>
    %152 = arith.addf %147, %151 : vector<4x32xf32>
    %153 = math.tanh %152 : vector<4x32xf32>
    %cst_30 = arith.constant 1.000000e+00 : f32
    %154 = vector.broadcast %cst_30 : f32 to vector<4x32xf32>
    %155 = arith.subf %154, %146 : vector<4x32xf32>
    %156 = arith.mulf %155, %153 : vector<4x32xf32>
    %157 = arith.mulf %146, %128 : vector<4x32xf32>
    %158 = arith.addf %156, %157 : vector<4x32xf32>
    %159 = vector.extract_strided_slice %5 {offsets = [20, 0], sizes = [4, 96], strides = [1, 1]} : vector<32x96xf32> to vector<4x96xf32>
    %cst_31 = arith.constant dense<0.000000e+00> : vector<4x96xf32>
    %160 = tpu.matmul %158, %6, %cst_31 {dimension_numbers = #tpu.dot_dimension_numbers<[1], [0], [0], [1], [0, 0, 1, 1], [], []>} : vector<4x32xf32>, vector<32x96xf32>, vector<4x96xf32> -> vector<4x96xf32>
    %161 = vector.extract_strided_slice %159 {offsets = [0, 0], sizes = [4, 32], strides = [1, 1]} : vector<4x96xf32> to vector<4x32xf32>
    %162 = vector.extract_strided_slice %160 {offsets = [0, 0], sizes = [4, 32], strides = [1, 1]} : vector<4x96xf32> to vector<4x32xf32>
    %163 = arith.addf %161, %162 : vector<4x32xf32>
    %164 = arith.negf %163 : vector<4x32xf32>
    %165 = math.exp %164 : vector<4x32xf32>
    %cst_32 = arith.constant 1.000000e+00 : f32
    %166 = vector.broadcast %cst_32 : f32 to vector<4x32xf32>
    %167 = arith.addf %166, %165 : vector<4x32xf32>
    %168 = arith.divf %166, %167 : vector<4x32xf32>
    %169 = vector.extract_strided_slice %159 {offsets = [0, 32], sizes = [4, 32], strides = [1, 1]} : vector<4x96xf32> to vector<4x32xf32>
    %170 = vector.extract_strided_slice %160 {offsets = [0, 32], sizes = [4, 32], strides = [1, 1]} : vector<4x96xf32> to vector<4x32xf32>
    %171 = arith.addf %169, %170 : vector<4x32xf32>
    %172 = arith.negf %171 : vector<4x32xf32>
    %173 = math.exp %172 : vector<4x32xf32>
    %cst_33 = arith.constant 1.000000e+00 : f32
    %174 = vector.broadcast %cst_33 : f32 to vector<4x32xf32>
    %175 = arith.addf %174, %173 : vector<4x32xf32>
    %176 = arith.divf %174, %175 : vector<4x32xf32>
    %177 = vector.extract_strided_slice %159 {offsets = [0, 64], sizes = [4, 32], strides = [1, 1]} : vector<4x96xf32> to vector<4x32xf32>
    %178 = vector.extract_strided_slice %160 {offsets = [0, 64], sizes = [4, 32], strides = [1, 1]} : vector<4x96xf32> to vector<4x32xf32>
    %179 = vector.broadcast %7 : vector<1x32xf32> to vector<4x32xf32>
    %180 = arith.addf %178, %179 : vector<4x32xf32>
    %181 = arith.mulf %168, %180 : vector<4x32xf32>
    %182 = arith.addf %177, %181 : vector<4x32xf32>
    %183 = math.tanh %182 : vector<4x32xf32>
    %cst_34 = arith.constant 1.000000e+00 : f32
    %184 = vector.broadcast %cst_34 : f32 to vector<4x32xf32>
    %185 = arith.subf %184, %176 : vector<4x32xf32>
    %186 = arith.mulf %185, %183 : vector<4x32xf32>
    %187 = arith.mulf %176, %158 : vector<4x32xf32>
    %188 = arith.addf %186, %187 : vector<4x32xf32>
    %189 = vector.extract_strided_slice %5 {offsets = [24, 0], sizes = [4, 96], strides = [1, 1]} : vector<32x96xf32> to vector<4x96xf32>
    %cst_35 = arith.constant dense<0.000000e+00> : vector<4x96xf32>
    %190 = tpu.matmul %188, %6, %cst_35 {dimension_numbers = #tpu.dot_dimension_numbers<[1], [0], [0], [1], [0, 0, 1, 1], [], []>} : vector<4x32xf32>, vector<32x96xf32>, vector<4x96xf32> -> vector<4x96xf32>
    %191 = vector.extract_strided_slice %189 {offsets = [0, 0], sizes = [4, 32], strides = [1, 1]} : vector<4x96xf32> to vector<4x32xf32>
    %192 = vector.extract_strided_slice %190 {offsets = [0, 0], sizes = [4, 32], strides = [1, 1]} : vector<4x96xf32> to vector<4x32xf32>
    %193 = arith.addf %191, %192 : vector<4x32xf32>
    %194 = arith.negf %193 : vector<4x32xf32>
    %195 = math.exp %194 : vector<4x32xf32>
    %cst_36 = arith.constant 1.000000e+00 : f32
    %196 = vector.broadcast %cst_36 : f32 to vector<4x32xf32>
    %197 = arith.addf %196, %195 : vector<4x32xf32>
    %198 = arith.divf %196, %197 : vector<4x32xf32>
    %199 = vector.extract_strided_slice %189 {offsets = [0, 32], sizes = [4, 32], strides = [1, 1]} : vector<4x96xf32> to vector<4x32xf32>
    %200 = vector.extract_strided_slice %190 {offsets = [0, 32], sizes = [4, 32], strides = [1, 1]} : vector<4x96xf32> to vector<4x32xf32>
    %201 = arith.addf %199, %200 : vector<4x32xf32>
    %202 = arith.negf %201 : vector<4x32xf32>
    %203 = math.exp %202 : vector<4x32xf32>
    %cst_37 = arith.constant 1.000000e+00 : f32
    %204 = vector.broadcast %cst_37 : f32 to vector<4x32xf32>
    %205 = arith.addf %204, %203 : vector<4x32xf32>
    %206 = arith.divf %204, %205 : vector<4x32xf32>
    %207 = vector.extract_strided_slice %189 {offsets = [0, 64], sizes = [4, 32], strides = [1, 1]} : vector<4x96xf32> to vector<4x32xf32>
    %208 = vector.extract_strided_slice %190 {offsets = [0, 64], sizes = [4, 32], strides = [1, 1]} : vector<4x96xf32> to vector<4x32xf32>
    %209 = vector.broadcast %7 : vector<1x32xf32> to vector<4x32xf32>
    %210 = arith.addf %208, %209 : vector<4x32xf32>
    %211 = arith.mulf %198, %210 : vector<4x32xf32>
    %212 = arith.addf %207, %211 : vector<4x32xf32>
    %213 = math.tanh %212 : vector<4x32xf32>
    %cst_38 = arith.constant 1.000000e+00 : f32
    %214 = vector.broadcast %cst_38 : f32 to vector<4x32xf32>
    %215 = arith.subf %214, %206 : vector<4x32xf32>
    %216 = arith.mulf %215, %213 : vector<4x32xf32>
    %217 = arith.mulf %206, %188 : vector<4x32xf32>
    %218 = arith.addf %216, %217 : vector<4x32xf32>
    %219 = vector.extract_strided_slice %5 {offsets = [28, 0], sizes = [4, 96], strides = [1, 1]} : vector<32x96xf32> to vector<4x96xf32>
    %cst_39 = arith.constant dense<0.000000e+00> : vector<4x96xf32>
    %220 = tpu.matmul %218, %6, %cst_39 {dimension_numbers = #tpu.dot_dimension_numbers<[1], [0], [0], [1], [0, 0, 1, 1], [], []>} : vector<4x32xf32>, vector<32x96xf32>, vector<4x96xf32> -> vector<4x96xf32>
    %221 = vector.extract_strided_slice %219 {offsets = [0, 0], sizes = [4, 32], strides = [1, 1]} : vector<4x96xf32> to vector<4x32xf32>
    %222 = vector.extract_strided_slice %220 {offsets = [0, 0], sizes = [4, 32], strides = [1, 1]} : vector<4x96xf32> to vector<4x32xf32>
    %223 = arith.addf %221, %222 : vector<4x32xf32>
    %224 = arith.negf %223 : vector<4x32xf32>
    %225 = math.exp %224 : vector<4x32xf32>
    %cst_40 = arith.constant 1.000000e+00 : f32
    %226 = vector.broadcast %cst_40 : f32 to vector<4x32xf32>
    %227 = arith.addf %226, %225 : vector<4x32xf32>
    %228 = arith.divf %226, %227 : vector<4x32xf32>
    %229 = vector.extract_strided_slice %219 {offsets = [0, 32], sizes = [4, 32], strides = [1, 1]} : vector<4x96xf32> to vector<4x32xf32>
    %230 = vector.extract_strided_slice %220 {offsets = [0, 32], sizes = [4, 32], strides = [1, 1]} : vector<4x96xf32> to vector<4x32xf32>
    %231 = arith.addf %229, %230 : vector<4x32xf32>
    %232 = arith.negf %231 : vector<4x32xf32>
    %233 = math.exp %232 : vector<4x32xf32>
    %cst_41 = arith.constant 1.000000e+00 : f32
    %234 = vector.broadcast %cst_41 : f32 to vector<4x32xf32>
    %235 = arith.addf %234, %233 : vector<4x32xf32>
    %236 = arith.divf %234, %235 : vector<4x32xf32>
    %237 = vector.extract_strided_slice %219 {offsets = [0, 64], sizes = [4, 32], strides = [1, 1]} : vector<4x96xf32> to vector<4x32xf32>
    %238 = vector.extract_strided_slice %220 {offsets = [0, 64], sizes = [4, 32], strides = [1, 1]} : vector<4x96xf32> to vector<4x32xf32>
    %239 = vector.broadcast %7 : vector<1x32xf32> to vector<4x32xf32>
    %240 = arith.addf %238, %239 : vector<4x32xf32>
    %241 = arith.mulf %228, %240 : vector<4x32xf32>
    %242 = arith.addf %237, %241 : vector<4x32xf32>
    %243 = math.tanh %242 : vector<4x32xf32>
    %cst_42 = arith.constant 1.000000e+00 : f32
    %244 = vector.broadcast %cst_42 : f32 to vector<4x32xf32>
    %245 = arith.subf %244, %236 : vector<4x32xf32>
    %246 = arith.mulf %245, %243 : vector<4x32xf32>
    %247 = arith.mulf %236, %218 : vector<4x32xf32>
    %248 = arith.addf %246, %247 : vector<4x32xf32>
    %249 = tpu.concatenate %38, %68, %98, %128, %158, %188, %218, %248 in 0 : vector<4x32xf32>, vector<4x32xf32>, vector<4x32xf32>, vector<4x32xf32>, vector<4x32xf32>, vector<4x32xf32>, vector<4x32xf32>, vector<4x32xf32> -> vector<32x32xf32>
    %cst_43 = arith.constant 0.000000e+00 : f32
    %250 = vector.broadcast %cst_43 : f32 to vector<32x32xf32>
    %251 = arith.maximumf %249, %250 : vector<32x32xf32>
    %c0_44 = arith.constant 0 : index
    %c0_45 = arith.constant 0 : index
    %252 = vector.load %arg6[%c0_44, %c0_45] : memref<32x6xf32, #tpu.memory_space<vmem>>, vector<32x6xf32>
    %cst_46 = arith.constant dense<0.000000e+00> : vector<32x6xf32>
    %253 = tpu.matmul %251, %252, %cst_46 {dimension_numbers = #tpu.dot_dimension_numbers<[1], [0], [0], [1], [0, 0, 1, 1], [], []>} : vector<32x32xf32>, vector<32x6xf32>, vector<32x6xf32> -> vector<32x6xf32>
    %c0_47 = arith.constant 0 : index
    %c0_48 = arith.constant 0 : index
    %254 = vector.load %arg7[%c0_47, %c0_48] : memref<1x6xf32, #tpu.memory_space<vmem>>, vector<1x6xf32>
    %255 = vector.broadcast %254 : vector<1x6xf32> to vector<32x6xf32>
    %256 = arith.addf %253, %255 : vector<32x6xf32>
    %c0_49 = arith.constant 0 : index
    %c0_50 = arith.constant 0 : index
    %257 = vector.load %arg8[%c0_49, %c0_50] : memref<32x6xf32, #tpu.memory_space<vmem>>, vector<32x6xf32>
    tpu.vector_store %arg8[%c0_49, %c0_50], %256 {strides = array<i32>} : memref<32x6xf32, #tpu.memory_space<vmem>>, vector<32x6xf32>,
    %c0_51 = arith.constant 0 : index
    %c0_52 = arith.constant 0 : index
    %258 = vector.load %arg9[%c0_51, %c0_52] : memref<4x32xf32, #tpu.memory_space<vmem>>, vector<4x32xf32>
    tpu.vector_store %arg9[%c0_51, %c0_52], %248 {strides = array<i32>} : memref<4x32xf32, #tpu.memory_space<vmem>>, vector<4x32xf32>,
    return
  }
}

</mosaic_0001>

<llo_original>
// kernel: tpu_custom_call.1
$region0: #{tpu_custom_call.1}
  #allocation0 [shape = 'u32[]', space=smem, size = 0x4, offset = 0x4, fixed_abs, tag = 'smem constant byte address 0x4 - core index']
  #allocation1 [shape = 'u32[144,128]{1,0:T(1,128)}', space=vmem, size = 0x12000, scoped, tag = 'internal scratch']
  %s0 = inlined_call_operand.vmem [shape: f32[32,16], index: 0, kind: input, shape index: {}]
  %s1 = inlined_call_operand.vmem [shape: f32[4,32], index: 1, kind: input, shape index: {}]
  %s2 = inlined_call_operand.vmem [shape: f32[16,96], index: 2, kind: input, shape index: {}]
  %s3 = inlined_call_operand.vmem [shape: f32[32,96], index: 3, kind: input, shape index: {}]
  %s4 = inlined_call_operand.vmem [shape: f32[1,96], index: 4, kind: input, shape index: {}]
  %s5 = inlined_call_operand.vmem [shape: f32[1,32], index: 5, kind: input, shape index: {}]
  %s6 = inlined_call_operand.vmem [shape: f32[32,6], index: 6, kind: input, shape index: {}]
  %s7 = inlined_call_operand.vmem [shape: f32[1,6], index: 7, kind: input, shape index: {}]
  %s8 = inlined_call_operand.vmem [shape: f32[32,6], index: 8, kind: output, shape index: {0}]
  %s9 = inlined_call_operand.hbm [shape: f32[4,32], index: 9, kind: output, shape index: {1}]
  %10 = xla_tuple %s8, %s9
  %s11 = sld [smem:[#allocation0]]
  $region50: #{tpu_custom_call.1} parent=0
    _
  %s13 = ssub.s32 1, %s11
  %s14 = scalar_select 0, %s13, %s11
  $region1: #{tpu_custom_call.1} parent=0
    #allocation2 [shape = 'u8[2048]{0}', space=vmem, size = 0x800, scoped, tag = 'output window, operand 1, single buffered']
    #allocation3 [shape = 's32[1]{0}', space=sflag, size = 0x4, scoped, tag = 'scoped memory for tpu_custom_call.1']
    %15 = vsyncpa [#allocation3], 0
    // Predicated region
    $region2: #{tpu_custom_call.1} parent=1 // pred_check
      _
    $region3: #{tpu_custom_call.1} parent=1 // pred_check_branch
      %17 = sbr.rel (0) target = $region5
    $region4: #{tpu_custom_call.1} parent=1 // pred_region
      _
    $region5: #{tpu_custom_call.1} parent=1 // pred_fallthru
      _
    // Predicated region
    $region6: #{tpu_custom_call.1} parent=1 // pred_check
      _
    $region7: #{tpu_custom_call.1} parent=1 // pred_check_branch
      %19 = sbr.rel (0) target = $region9
    $region8: #{tpu_custom_call.1} parent=1 // pred_region
      _
    $region9: #{tpu_custom_call.1} parent=1 // pred_fallthru
      _
    // Predicated region
    $region10: #{tpu_custom_call.1} parent=1 // pred_check
      _
    $region11: #{tpu_custom_call.1} parent=1 // pred_check_branch
      %21 = sbr.rel (0) target = $region13
    $region12: #{tpu_custom_call.1} parent=1 // pred_region
      _
    $region13: #{tpu_custom_call.1} parent=1 // pred_fallthru
      _
    // Predicated region
    $region14: #{tpu_custom_call.1} parent=1 // pred_check
      _
    $region15: #{tpu_custom_call.1} parent=1 // pred_check_branch
      %23 = sbr.rel (0) target = $region17
    $region16: #{tpu_custom_call.1} parent=1 // pred_region
      _
    $region17: #{tpu_custom_call.1} parent=1 // pred_fallthru
      _
    // Predicated region
    $region18: #{tpu_custom_call.1} parent=1 // pred_check
      _
    $region19: #{tpu_custom_call.1} parent=1 // pred_check_branch
      %25 = sbr.rel (0) target = $region21
    $region20: #{tpu_custom_call.1} parent=1 // pred_region
      _
    $region21: #{tpu_custom_call.1} parent=1 // pred_fallthru
      _
    // Predicated region
    $region22: #{tpu_custom_call.1} parent=1 // pred_check
      _
    $region23: #{tpu_custom_call.1} parent=1 // pred_check_branch
      %27 = sbr.rel (0) target = $region25
    $region24: #{tpu_custom_call.1} parent=1 // pred_region
      _
    $region25: #{tpu_custom_call.1} parent=1 // pred_fallthru
      _
    // Predicated region
    $region26: #{tpu_custom_call.1} parent=1 // pred_check
      _
    $region27: #{tpu_custom_call.1} parent=1 // pred_check_branch
      %29 = sbr.rel (0) target = $region29
    $region28: #{tpu_custom_call.1} parent=1 // pred_region
      _
    $region29: #{tpu_custom_call.1} parent=1 // pred_fallthru
      _
    // Predicated region
    $region30: #{tpu_custom_call.1} parent=1 // pred_check
      _
    $region31: #{tpu_custom_call.1} parent=1 // pred_check_branch
      %31 = sbr.rel (0) target = $region33
    $region32: #{tpu_custom_call.1} parent=1 // pred_region
      _
    $region33: #{tpu_custom_call.1} parent=1 // pred_fallthru
      _
    %v32 = vld [vmem:[%s0] sm:$0xff]
    %v33 = vld [vmem:[%s0 + $0x8] sm:$0xff]
    %v34 = vld [vmem:[%s0 + $0x10] sm:$0xff]
    %v35 = vld [vmem:[%s0 + $0x18] sm:$0xff]
    %v36 = vld [vmem:[%s2] sm:$0xff]
    %v37 = vld [vmem:[%s2 + $0x8] sm:$0xff]
    %v38 = vld [vmem:[%s4] sm:$0x1]
    %v40 = vlaneseq
    %v41 = vshrl.u32 %v40, 7
    %v42 = vsub.s32 0, %v41
    %v43 = vrot.slane %v38, %v42
    %vm45 = vcmask 130048
    %v47 = vsel %vm45, %v32, 0
    %v50 = vsel %vm45, %v33, 0
    %v53 = vsel %vm45, %v34, 0
    %v56 = vsel %vm45, %v35, 0
    %58 = vmatprep.subr.mxu0 0.0
    %59 = vmatpush1.msra.mxu0 %v36
    %60 = vmatprep.subr.mxu0 0.0
    %61 = vmatpush1.msra.mxu0 %v37
    %62 = vmatprep.subr.mxu0 0.0
    %63 = vmatpush1.msra.mxu0 0.0
    %64 = vmatprep.subr.mxu0 0.0
    %65 = vmatpush1.msra.mxu0 0.0
    %66 = vmatprep.subr.mxu0 0.0
    %67 = vmatpush1.msra.mxu0 0.0
    %68 = vmatprep.subr.mxu0 0.0
    %69 = vmatpush1.msra.mxu0 0.0
    %70 = vmatprep.subr.mxu0 0.0
    %71 = vmatpush1.msra.mxu0 0.0
    %72 = vmatprep.subr.mxu0 0.0
    %73 = vmatpush1.msra.mxu0 0.0
    %74 = vmatprep.subr.mxu0 0.0
    %75 = vmatpush1.msra.mxu0 0.0
    %76 = vmatprep.subr.mxu0 0.0
    %77 = vmatpush1.msra.mxu0 0.0
    %78 = vmatprep.subr.mxu0 0.0
    %79 = vmatpush1.msra.mxu0 0.0
    %80 = vmatprep.subr.mxu0 0.0
    %81 = vmatpush1.msra.mxu0 0.0
    %82 = vmatprep.subr.mxu0 0.0
    %83 = vmatpush1.msra.mxu0 0.0
    %84 = vmatprep.subr.mxu0 0.0
    %85 = vmatpush1.msra.mxu0 0.0
    %86 = vmatprep.subr.mxu0 0.0
    %87 = vmatpush1.msra.mxu0 0.0
    %88 = vmatprep.subr.mxu0 0.0
    %89 = vmatpush1.msra.mxu0 0.0
    %90 = vmatprep.subr.mxu0 0.0
    %91 = vmatpush1.msra.mxu0 0.0
    %92 = vmatprep.subr.mxu0 0.0
    %93 = vmatpush1.msra.mxu0 0.0
    %94 = vmatprep.subr.mxu0 0.0
    %95 = vmatpush1.msra.mxu0 0.0
    %96 = vmatprep.subr.mxu0 0.0
    %97 = vmatpush1.msra.mxu0 0.0
    %98 = vmatprep.subr.mxu0 0.0
    %99 = vmatpush1.msra.mxu0 0.0
    %100 = vmatprep.subr.mxu0 0.0
    %101 = vmatpush1.msra.mxu0 0.0
    %102 = vmatprep.subr.mxu0 0.0
    %103 = vmatpush1.msra.mxu0 0.0
    %104 = vmatprep.subr.mxu0 0.0
    %105 = vmatpush1.msra.mxu0 0.0
    %106 = vmatprep.subr.mxu0 0.0
    %107 = vmatpush1.msra.mxu0 0.0
    %108 = vmatprep.subr.mxu0 0.0
    %109 = vmatpush1.msra.mxu0 0.0
    %110 = vmatprep.subr.mxu0 0.0
    %111 = vmatpush1.msra.mxu0 0.0
    %112 = vmatprep.subr.mxu0 0.0
    %113 = vmatpush1.msra.mxu0 0.0
    %114 = vmatprep.subr.mxu0 0.0
    %115 = vmatpush1.msra.mxu0 0.0
    %116 = vmatprep.subr.mxu0 0.0
    %117 = vmatpush1.msra.mxu0 0.0
    %118 = vmatprep.subr.mxu0 0.0
    %119 = vmatpush1.msra.mxu0 0.0
    %120 = vmatprep.subr.mxu0 0.0
    %121 = vmatpush1.msra.mxu0 0.0
    %122 = vmatprep.mubr.f32.mxu0 0.0
    %123 = vmatmul.mubr.f32.gmra.mrb[0].mxu0 %v47
    %v124 = vpop.f32.mrb[0].mxu0
    %v125 = vadd.f32 %v43, %v124
    %v126 = vpop.f32.mrb[0].mxu0
    %127 = vmatprep.mubr.f32.mxu0 0.0
    %128 = vmatmul.mubr.f32.gmra.mrb[0].mxu0 %v50
    %v129 = vpop.f32.mrb[0].mxu0
    %v130 = vadd.f32 %v43, %v129
    %v131 = vpop.f32.mrb[0].mxu0
    %132 = vmatprep.mubr.f32.mxu0 0.0
    %133 = vmatmul.mubr.f32.gmra.mrb[0].mxu0 %v53
    %v134 = vpop.f32.mrb[0].mxu0
    %v135 = vadd.f32 %v43, %v134
    %v136 = vpop.f32.mrb[0].mxu0
    %137 = vmatprep.mubr.f32.mxu0 0.0
    %138 = vmatmul.mubr.f32.gmra.mrb[0].mxu0 %v56
    %v139 = vpop.f32.mrb[0].mxu0
    %v140 = vadd.f32 %v43, %v139
    %v141 = vpop.f32.mrb[0].mxu0
    %142 = vdwg.mxu0
    %v143 = vld [vmem:[%s3] sm:$0xff]
    %v144 = vld [vmem:[%s3 + $0x8] sm:$0xff]
    %v145 = vld [vmem:[%s3 + $0x10] sm:$0xff]
    %v146 = vld [vmem:[%s3 + $0x18] sm:$0xff]
    %v147 = vld [vmem:[%s5] sm:$0x1]
    %v148 = vld [vmem:[%s1] sm:$0xf]
    %vm149 = vcmask 261120
    %v151 = vsel %vm149, %v148, 0
    %153 = vmatprep.subr.mxu0 0.0
    %154 = vmatpush1.msra.mxu0 %v143
    %155 = vmatprep.subr.mxu0 0.0
    %156 = vmatpush1.msra.mxu0 %v144
    %157 = vmatprep.subr.mxu0 0.0
    %158 = vmatpush1.msra.mxu0 %v145
    %159 = vmatprep.subr.mxu0 0.0
    %160 = vmatpush1.msra.mxu0 %v146
    %161 = vmatprep.subr.mxu0 0.0
    %162 = vmatpush1.msra.mxu0 0.0
    %163 = vmatprep.subr.mxu0 0.0
    %164 = vmatpush1.msra.mxu0 0.0
    %165 = vmatprep.subr.mxu0 0.0
    %166 = vmatpush1.msra.mxu0 0.0
    %167 = vmatprep.subr.mxu0 0.0
    %168 = vmatpush1.msra.mxu0 0.0
    %169 = vmatprep.subr.mxu0 0.0
    %170 = vmatpush1.msra.mxu0 0.0
    %171 = vmatprep.subr.mxu0 0.0
    %172 = vmatpush1.msra.mxu0 0.0
    %173 = vmatprep.subr.mxu0 0.0
    %174 = vmatpush1.msra.mxu0 0.0
    %175 = vmatprep.subr.mxu0 0.0
    %176 = vmatpush1.msra.mxu0 0.0
    %177 = vmatprep.subr.mxu0 0.0
    %178 = vmatpush1.msra.mxu0 0.0
    %179 = vmatprep.subr.mxu0 0.0
    %180 = vmatpush1.msra.mxu0 0.0
    %181 = vmatprep.subr.mxu0 0.0
    %182 = vmatpush1.msra.mxu0 0.0
    %183 = vmatprep.subr.mxu0 0.0
    %184 = vmatpush1.msra.mxu0 0.0
    %185 = vmatprep.subr.mxu0 0.0
    %186 = vmatpush1.msra.mxu0 0.0
    %187 = vmatprep.subr.mxu0 0.0
    %188 = vmatpush1.msra.mxu0 0.0
    %189 = vmatprep.subr.mxu0 0.0
    %190 = vmatpush1.msra.mxu0 0.0
    %191 = vmatprep.subr.mxu0 0.0
    %192 = vmatpush1.msra.mxu0 0.0
    %193 = vmatprep.subr.mxu0 0.0
    %194 = vmatpush1.msra.mxu0 0.0
    %195 = vmatprep.subr.mxu0 0.0
    %196 = vmatpush1.msra.mxu0 0.0
    %197 = vmatprep.subr.mxu0 0.0
    %198 = vmatpush1.msra.mxu0 0.0
    %199 = vmatprep.subr.mxu0 0.0
    %200 = vmatpush1.msra.mxu0 0.0
    %201 = vmatprep.subr.mxu0 0.0
    %202 = vmatpush1.msra.mxu0 0.0
    %203 = vmatprep.subr.mxu0 0.0
    %204 = vmatpush1.msra.mxu0 0.0
    %205 = vmatprep.subr.mxu0 0.0
    %206 = vmatpush1.msra.mxu0 0.0
    %207 = vmatprep.subr.mxu0 0.0
    %208 = vmatpush1.msra.mxu0 0.0
    %209 = vmatprep.subr.mxu0 0.0
    %210 = vmatpush1.msra.mxu0 0.0
    %211 = vmatprep.subr.mxu0 0.0
    %212 = vmatpush1.msra.mxu0 0.0
    %213 = vmatprep.subr.mxu0 0.0
    %214 = vmatpush1.msra.mxu0 0.0
    %215 = vmatprep.subr.mxu0 0.0
    %216 = vmatpush1.msra.mxu0 0.0
    %217 = vmatprep.mubr.f32.mxu0 0.0
    %218 = vmatmul.mubr.f32.gmra.mrb[0].mxu0 %v151
    %v219 = vpop.f32.mrb[0].mxu0
    %v220 = vadd.f32 0.0, %v219
    %v221 = vpop.f32.mrb[0].mxu0
    %222 = vdwg.mxu0
    %v223 = vadd.f32 %v125, %v220
    %v224 = vxor.u32 %v223, 2147483648
    %v225 = vmul.f32 %v224, 1.442695
    %v226 = vpow.pop %v225
    %v227 = vadd.f32 %v226, 1.0
    %v228 = vrcp.pop %v227
    %v229 = vmul.f32 1.0, %v228
    %v231 = vlaneseq
    %v232 = vshrl.u32 %v231, 7
    %v233 = vsub.s32 0, %v232
    %v234 = vrot.slane %v147, %v233
    %235 = vrot.lane.b32.xlu0 %v234, 64
    %v236 = vpop.permute.xlu0 %235
    %v238 = vadd.f32 %v220, %v236
    %240 = vrot.lane.b32.xlu0 %v238, 64
    %v241 = vpop.permute.xlu0 %240
    %v243 = vmul.f32 %v229, %v241
    %245 = vrot.lane.b32.xlu0 %v243, 64
    %v246 = vpop.permute.xlu0 %245
    %v248 = vadd.f32 %v125, %v246
    %v249 = vtanh.pop %v248
    %v250 = vsub.f32 1.0, %v229
    %252 = vrot.lane.b32.xlu0 %v249, 96
    %v253 = vpop.permute.xlu0 %252
    %v255 = vmul.f32 %v250, %v253
    %256 = vrot.lane.b32.xlu0 %v148, 32
    %v257 = vpop.permute.xlu0 %256
    %v259 = vmul.f32 %v229, %v257
    %v260 = vadd.f32 %v255, %v259
    %262 = vrot.lane.b32.xlu0 %v260, 96
    %v263 = vpop.permute.xlu0 %262
    %v264 = vsel %vm149, %v263, 0
    %266 = vmatprep.subr.mxu0 0.0
    %267 = vmatpush1.msra.mxu0 %v143
    %268 = vmatprep.subr.mxu0 0.0
    %269 = vmatpush1.msra.mxu0 %v144
    %270 = vmatprep.subr.mxu0 0.0
    %271 = vmatpush1.msra.mxu0 %v145
    %272 = vmatprep.subr.mxu0 0.0
    %273 = vmatpush1.msra.mxu0 %v146
    %274 = vmatprep.subr.mxu0 0.0
    %275 = vmatpush1.msra.mxu0 0.0
    %276 = vmatprep.subr.mxu0 0.0
    %277 = vmatpush1.msra.mxu0 0.0
    %278 = vmatprep.subr.mxu0 0.0
    %279 = vmatpush1.msra.mxu0 0.0
    %280 = vmatprep.subr.mxu0 0.0
    %281 = vmatpush1.msra.mxu0 0.0
    %282 = vmatprep.subr.mxu0 0.0
    %283 = vmatpush1.msra.mxu0 0.0
    %284 = vmatprep.subr.mxu0 0.0
    %285 = vmatpush1.msra.mxu0 0.0
    %286 = vmatprep.subr.mxu0 0.0
    %287 = vmatpush1.msra.mxu0 0.0
    %288 = vmatprep.subr.mxu0 0.0
    %289 = vmatpush1.msra.mxu0 0.0
    %290 = vmatprep.subr.mxu0 0.0
    %291 = vmatpush1.msra.mxu0 0.0
    %292 = vmatprep.subr.mxu0 0.0
    %293 = vmatpush1.msra.mxu0 0.0
    %294 = vmatprep.subr.mxu0 0.0
    %295 = vmatpush1.msra.mxu0 0.0
    %296 = vmatprep.subr.mxu0 0.0
    %297 = vmatpush1.msra.mxu0 0.0
    %298 = vmatprep.subr.mxu0 0.0
    %299 = vmatpush1.msra.mxu0 0.0
    %300 = vmatprep.subr.mxu0 0.0
    %301 = vmatpush1.msra.mxu0 0.0
    %302 = vmatprep.subr.mxu0 0.0
    %303 = vmatpush1.msra.mxu0 0.0
    %304 = vmatprep.subr.mxu0 0.0
    %305 = vmatpush1.msra.mxu0 0.0
    %306 = vmatprep.subr.mxu0 0.0
    %307 = vmatpush1.msra.mxu0 0.0
    %308 = vmatprep.subr.mxu0 0.0
    %309 = vmatpush1.msra.mxu0 0.0
    %310 = vmatprep.subr.mxu0 0.0
    %311 = vmatpush1.msra.mxu0 0.0
    %312 = vmatprep.subr.mxu0 0.0
    %313 = vmatpush1.msra.mxu0 0.0
    %314 = vmatprep.subr.mxu0 0.0
    %315 = vmatpush1.msra.mxu0 0.0
    %316 = vmatprep.subr.mxu0 0.0
    %317 = vmatpush1.msra.mxu0 0.0
    %318 = vmatprep.subr.mxu0 0.0
    %319 = vmatpush1.msra.mxu0 0.0
    %320 = vmatprep.subr.mxu0 0.0
    %321 = vmatpush1.msra.mxu0 0.0
    %322 = vmatprep.subr.mxu0 0.0
    %323 = vmatpush1.msra.mxu0 0.0
    %324 = vmatprep.subr.mxu0 0.0
    %325 = vmatpush1.msra.mxu0 0.0
    %326 = vmatprep.subr.mxu0 0.0
    %327 = vmatpush1.msra.mxu0 0.0
    %328 = vmatprep.subr.mxu0 0.0
    %329 = vmatpush1.msra.mxu0 0.0
    %330 = vmatprep.mubr.f32.mxu0 0.0
    %331 = vmatmul.mubr.f32.gmra.mrb[0].mxu0 %v264
    %v332 = vpop.f32.mrb[0].mxu0
    %v333 = vadd.f32 0.0, %v332
    %v334 = vpop.f32.mrb[0].mxu0
    %335 = vdwg.mxu0
    %v337 = vrot.slane %v333, 4
    %v339 = vadd.f32 %v125, %v337
    %v340 = vxor.u32 %v339, 2147483648
    %v341 = vmul.f32 %v340, 1.442695
    %v342 = vpow.pop %v341
    %v343 = vadd.f32 %v342, 1.0
    %v344 = vrcp.pop %v343
    %v345 = vmul.f32 1.0, %v344
    %v346 = vadd.f32 %v333, %v236
    %v348 = vrot.slane %v346, 4
    %349 = vrot.lane.b32.xlu0 %v348, 64
    %v350 = vpop.permute.xlu0 %349
    %v352 = vmul.f32 %v345, %v350
    %354 = vrot.lane.b32.xlu0 %v352, 64
    %v355 = vpop.permute.xlu0 %354
    %v357 = vadd.f32 %v125, %v355
    %v358 = vtanh.pop %v357
    %v359 = vsub.f32 1.0, %v345
    %361 = vrot.lane.b32.xlu0 %v358, 96
    %v362 = vpop.permute.xlu0 %361
    %v364 = vmul.f32 %v359, %v362
    %v365 = vrot.slane %v260, 4
    %v367 = vmul.f32 %v345, %v365
    %v368 = vadd.f32 %v364, %v367
    %v370 = vrot.slane %v368, 4
    %371 = vrot.lane.b32.xlu0 %v370, 96
    %v372 = vpop.permute.xlu0 %371
    %v373 = vsel %vm149, %v372, 0
    %375 = vmatprep.subr.mxu0 0.0
    %376 = vmatpush1.msra.mxu0 %v143
    %377 = vmatprep.subr.mxu0 0.0
    %378 = vmatpush1.msra.mxu0 %v144
    %379 = vmatprep.subr.mxu0 0.0
    %380 = vmatpush1.msra.mxu0 %v145
    %381 = vmatprep.subr.mxu0 0.0
    %382 = vmatpush1.msra.mxu0 %v146
    %383 = vmatprep.subr.mxu0 0.0
    %384 = vmatpush1.msra.mxu0 0.0
    %385 = vmatprep.subr.mxu0 0.0
    %386 = vmatpush1.msra.mxu0 0.0
    %387 = vmatprep.subr.mxu0 0.0
    %388 = vmatpush1.msra.mxu0 0.0
    %389 = vmatprep.subr.mxu0 0.0
    %390 = vmatpush1.msra.mxu0 0.0
    %391 = vmatprep.subr.mxu0 0.0
    %392 = vmatpush1.msra.mxu0 0.0
    %393 = vmatprep.subr.mxu0 0.0
    %394 = vmatpush1.msra.mxu0 0.0
    %395 = vmatprep.subr.mxu0 0.0
    %396 = vmatpush1.msra.mxu0 0.0
    %397 = vmatprep.subr.mxu0 0.0
    %398 = vmatpush1.msra.mxu0 0.0
    %399 = vmatprep.subr.mxu0 0.0
    %400 = vmatpush1.msra.mxu0 0.0
    %401 = vmatprep.subr.mxu0 0.0
    %402 = vmatpush1.msra.mxu0 0.0
    %403 = vmatprep.subr.mxu0 0.0
    %404 = vmatpush1.msra.mxu0 0.0
    %405 = vmatprep.subr.mxu0 0.0
    %406 = vmatpush1.msra.mxu0 0.0
    %407 = vmatprep.subr.mxu0 0.0
    %408 = vmatpush1.msra.mxu0 0.0
    %409 = vmatprep.subr.mxu0 0.0
    %410 = vmatpush1.msra.mxu0 0.0
    %411 = vmatprep.subr.mxu0 0.0
    %412 = vmatpush1.msra.mxu0 0.0
    %413 = vmatprep.subr.mxu0 0.0
    %414 = vmatpush1.msra.mxu0 0.0
    %415 = vmatprep.subr.mxu0 0.0
    %416 = vmatpush1.msra.mxu0 0.0
    %417 = vmatprep.subr.mxu0 0.0
    %418 = vmatpush1.msra.mxu0 0.0
    %419 = vmatprep.subr.mxu0 0.0
    %420 = vmatpush1.msra.mxu0 0.0
    %421 = vmatprep.subr.mxu0 0.0
    %422 = vmatpush1.msra.mxu0 0.0
    %423 = vmatprep.subr.mxu0 0.0
    %424 = vmatpush1.msra.mxu0 0.0
    %425 = vmatprep.subr.mxu0 0.0
    %426 = vmatpush1.msra.mxu0 0.0
    %427 = vmatprep.subr.mxu0 0.0
    %428 = vmatpush1.msra.mxu0 0.0
    %429 = vmatprep.subr.mxu0 0.0
    %430 = vmatpush1.msra.mxu0 0.0
    %431 = vmatprep.subr.mxu0 0.0
    %432 = vmatpush1.msra.mxu0 0.0
    %433 = vmatprep.subr.mxu0 0.0
    %434 = vmatpush1.msra.mxu0 0.0
    %435 = vmatprep.subr.mxu0 0.0
    %436 = vmatpush1.msra.mxu0 0.0
    %437 = vmatprep.subr.mxu0 0.0
    %438 = vmatpush1.msra.mxu0 0.0
    %439 = vmatprep.mubr.f32.mxu0 0.0
    %440 = vmatmul.mubr.f32.gmra.mrb[0].mxu0 %v373
    %v441 = vpop.f32.mrb[0].mxu0
    %v442 = vadd.f32 0.0, %v441
    %v443 = vpop.f32.mrb[0].mxu0
    %444 = vdwg.mxu0
    %v445 = vadd.f32 %v130, %v442
    %v446 = vxor.u32 %v445, 2147483648
    %v447 = vmul.f32 %v446, 1.442695
    %v448 = vpow.pop %v447
    %v449 = vadd.f32 %v448, 1.0
    %v450 = vrcp.pop %v449
    %v451 = vmul.f32 1.0, %v450
    %v452 = vadd.f32 %v442, %v236
    %454 = vrot.lane.b32.xlu0 %v452, 64
    %v455 = vpop.permute.xlu0 %454
    %v457 = vmul.f32 %v451, %v455
    %459 = vrot.lane.b32.xlu0 %v457, 64
    %v460 = vpop.permute.xlu0 %459
    %v462 = vadd.f32 %v130, %v460
    %v463 = vtanh.pop %v462
    %v464 = vsub.f32 1.0, %v451
    %466 = vrot.lane.b32.xlu0 %v463, 96
    %v467 = vpop.permute.xlu0 %466
    %v469 = vmul.f32 %v464, %v467
    %v471 = vmul.f32 %v451, %v370
    %v472 = vadd.f32 %v469, %v471
    %474 = vrot.lane.b32.xlu0 %v472, 96
    %v475 = vpop.permute.xlu0 %474
    %v476 = vsel %vm149, %v475, 0
    %478 = vmatprep.subr.mxu0 0.0
    %479 = vmatpush1.msra.mxu0 %v143
    %480 = vmatprep.subr.mxu0 0.0
    %481 = vmatpush1.msra.mxu0 %v144
    %482 = vmatprep.subr.mxu0 0.0
    %483 = vmatpush1.msra.mxu0 %v145
    %484 = vmatprep.subr.mxu0 0.0
    %485 = vmatpush1.msra.mxu0 %v146
    %486 = vmatprep.subr.mxu0 0.0
    %487 = vmatpush1.msra.mxu0 0.0
    %488 = vmatprep.subr.mxu0 0.0
    %489 = vmatpush1.msra.mxu0 0.0
    %490 = vmatprep.subr.mxu0 0.0
    %491 = vmatpush1.msra.mxu0 0.0
    %492 = vmatprep.subr.mxu0 0.0
    %493 = vmatpush1.msra.mxu0 0.0
    %494 = vmatprep.subr.mxu0 0.0
    %495 = vmatpush1.msra.mxu0 0.0
    %496 = vmatprep.subr.mxu0 0.0
    %497 = vmatpush1.msra.mxu0 0.0
    %498 = vmatprep.subr.mxu0 0.0
    %499 = vmatpush1.msra.mxu0 0.0
    %500 = vmatprep.subr.mxu0 0.0
    %501 = vmatpush1.msra.mxu0 0.0
    %502 = vmatprep.subr.mxu0 0.0
    %503 = vmatpush1.msra.mxu0 0.0
    %504 = vmatprep.subr.mxu0 0.0
    %505 = vmatpush1.msra.mxu0 0.0
    %506 = vmatprep.subr.mxu0 0.0
    %507 = vmatpush1.msra.mxu0 0.0
    %508 = vmatprep.subr.mxu0 0.0
    %509 = vmatpush1.msra.mxu0 0.0
    %510 = vmatprep.subr.mxu0 0.0
    %511 = vmatpush1.msra.mxu0 0.0
    %512 = vmatprep.subr.mxu0 0.0
    %513 = vmatpush1.msra.mxu0 0.0
    %514 = vmatprep.subr.mxu0 0.0
    %515 = vmatpush1.msra.mxu0 0.0
    %516 = vmatprep.subr.mxu0 0.0
    %517 = vmatpush1.msra.mxu0 0.0
    %518 = vmatprep.subr.mxu0 0.0
    %519 = vmatpush1.msra.mxu0 0.0
    %520 = vmatprep.subr.mxu0 0.0
    %521 = vmatpush1.msra.mxu0 0.0
    %522 = vmatprep.subr.mxu0 0.0
    %523 = vmatpush1.msra.mxu0 0.0
    %524 = vmatprep.subr.mxu0 0.0
    %525 = vmatpush1.msra.mxu0 0.0
    %526 = vmatprep.subr.mxu0 0.0
    %527 = vmatpush1.msra.mxu0 0.0
    %528 = vmatprep.subr.mxu0 0.0
    %529 = vmatpush1.msra.mxu0 0.0
    %530 = vmatprep.subr.mxu0 0.0
    %531 = vmatpush1.msra.mxu0 0.0
    %532 = vmatprep.subr.mxu0 0.0
    %533 = vmatpush1.msra.mxu0 0.0
    %534 = vmatprep.subr.mxu0 0.0
    %535 = vmatpush1.msra.mxu0 0.0
    %536 = vmatprep.subr.mxu0 0.0
    %537 = vmatpush1.msra.mxu0 0.0
    %538 = vmatprep.subr.mxu0 0.0
    %539 = vmatpush1.msra.mxu0 0.0
    %540 = vmatprep.subr.mxu0 0.0
    %541 = vmatpush1.msra.mxu0 0.0
    %542 = vmatprep.mubr.f32.mxu0 0.0
    %543 = vmatmul.mubr.f32.gmra.mrb[0].mxu0 %v476
    %v544 = vpop.f32.mrb[0].mxu0
    %v545 = vadd.f32 0.0, %v544
    %v546 = vpop.f32.mrb[0].mxu0
    %547 = vdwg.mxu0
    %v549 = vrot.slane %v545, 4
    %v551 = vadd.f32 %v130, %v549
    %v552 = vxor.u32 %v551, 2147483648
    %v553 = vmul.f32 %v552, 1.442695
    %v554 = vpow.pop %v553
    %v555 = vadd.f32 %v554, 1.0
    %v556 = vrcp.pop %v555
    %v557 = vmul.f32 1.0, %v556
    %v558 = vadd.f32 %v545, %v236
    %v560 = vrot.slane %v558, 4
    %561 = vrot.lane.b32.xlu0 %v560, 64
    %v562 = vpop.permute.xlu0 %561
    %v564 = vmul.f32 %v557, %v562
    %566 = vrot.lane.b32.xlu0 %v564, 64
    %v567 = vpop.permute.xlu0 %566
    %v569 = vadd.f32 %v130, %v567
    %v570 = vtanh.pop %v569
    %v571 = vsub.f32 1.0, %v557
    %573 = vrot.lane.b32.xlu0 %v570, 96
    %v574 = vpop.permute.xlu0 %573
    %v576 = vmul.f32 %v571, %v574
    %v577 = vrot.slane %v472, 4
    %v579 = vmul.f32 %v557, %v577
    %v580 = vadd.f32 %v576, %v579
    %v582 = vrot.slane %v580, 4
    %583 = vrot.lane.b32.xlu0 %v582, 96
    %v584 = vpop.permute.xlu0 %583
    %v585 = vsel %vm149, %v584, 0
    %587 = vmatprep.subr.mxu0 0.0
    %588 = vmatpush1.msra.mxu0 %v143
    %589 = vmatprep.subr.mxu0 0.0
    %590 = vmatpush1.msra.mxu0 %v144
    %591 = vmatprep.subr.mxu0 0.0
    %592 = vmatpush1.msra.mxu0 %v145
    %593 = vmatprep.subr.mxu0 0.0
    %594 = vmatpush1.msra.mxu0 %v146
    %595 = vmatprep.subr.mxu0 0.0
    %596 = vmatpush1.msra.mxu0 0.0
    %597 = vmatprep.subr.mxu0 0.0
    %598 = vmatpush1.msra.mxu0 0.0
    %599 = vmatprep.subr.mxu0 0.0
    %600 = vmatpush1.msra.mxu0 0.0
    %601 = vmatprep.subr.mxu0 0.0
    %602 = vmatpush1.msra.mxu0 0.0
    %603 = vmatprep.subr.mxu0 0.0
    %604 = vmatpush1.msra.mxu0 0.0
    %605 = vmatprep.subr.mxu0 0.0
    %606 = vmatpush1.msra.mxu0 0.0
    %607 = vmatprep.subr.mxu0 0.0
    %608 = vmatpush1.msra.mxu0 0.0
    %609 = vmatprep.subr.mxu0 0.0
    %610 = vmatpush1.msra.mxu0 0.0
    %611 = vmatprep.subr.mxu0 0.0
    %612 = vmatpush1.msra.mxu0 0.0
    %613 = vmatprep.subr.mxu0 0.0
    %614 = vmatpush1.msra.mxu0 0.0
    %615 = vmatprep.subr.mxu0 0.0
    %616 = vmatpush1.msra.mxu0 0.0
    %617 = vmatprep.subr.mxu0 0.0
    %618 = vmatpush1.msra.mxu0 0.0
    %619 = vmatprep.subr.mxu0 0.0
    %620 = vmatpush1.msra.mxu0 0.0
    %621 = vmatprep.subr.mxu0 0.0
    %622 = vmatpush1.msra.mxu0 0.0
    %623 = vmatprep.subr.mxu0 0.0
    %624 = vmatpush1.msra.mxu0 0.0
    %625 = vmatprep.subr.mxu0 0.0
    %626 = vmatpush1.msra.mxu0 0.0
    %627 = vmatprep.subr.mxu0 0.0
    %628 = vmatpush1.msra.mxu0 0.0
    %629 = vmatprep.subr.mxu0 0.0
    %630 = vmatpush1.msra.mxu0 0.0
    %631 = vmatprep.subr.mxu0 0.0
    %632 = vmatpush1.msra.mxu0 0.0
    %633 = vmatprep.subr.mxu0 0.0
    %634 = vmatpush1.msra.mxu0 0.0
    %635 = vmatprep.subr.mxu0 0.0
    %636 = vmatpush1.msra.mxu0 0.0
    %637 = vmatprep.subr.mxu0 0.0
    %638 = vmatpush1.msra.mxu0 0.0
    %639 = vmatprep.subr.mxu0 0.0
    %640 = vmatpush1.msra.mxu0 0.0
    %641 = vmatprep.subr.mxu0 0.0
    %642 = vmatpush1.msra.mxu0 0.0
    %643 = vmatprep.subr.mxu0 0.0
    %644 = vmatpush1.msra.mxu0 0.0
    %645 = vmatprep.subr.mxu0 0.0
    %646 = vmatpush1.msra.mxu0 0.0
    %647 = vmatprep.subr.mxu0 0.0
    %648 = vmatpush1.msra.mxu0 0.0
    %649 = vmatprep.subr.mxu0 0.0
    %650 = vmatpush1.msra.mxu0 0.0
    %651 = vmatprep.mubr.f32.mxu0 0.0
    %652 = vmatmul.mubr.f32.gmra.mrb[0].mxu0 %v585
    %v653 = vpop.f32.mrb[0].mxu0
    %v654 = vadd.f32 0.0, %v653
    %v655 = vpop.f32.mrb[0].mxu0
    %656 = vdwg.mxu0
    %v657 = vadd.f32 %v135, %v654
    %v658 = vxor.u32 %v657, 2147483648
    %v659 = vmul.f32 %v658, 1.442695
    %v660 = vpow.pop %v659
    %v661 = vadd.f32 %v660, 1.0
    %v662 = vrcp.pop %v661
    %v663 = vmul.f32 1.0, %v662
    %v664 = vadd.f32 %v654, %v236
    %666 = vrot.lane.b32.xlu0 %v664, 64
    %v667 = vpop.permute.xlu0 %666
    %v669 = vmul.f32 %v663, %v667
    %671 = vrot.lane.b32.xlu0 %v669, 64
    %v672 = vpop.permute.xlu0 %671
    %v674 = vadd.f32 %v135, %v672
    %v675 = vtanh.pop %v674
    %v676 = vsub.f32 1.0, %v663
    %678 = vrot.lane.b32.xlu0 %v675, 96
    %v679 = vpop.permute.xlu0 %678
    %v681 = vmul.f32 %v676, %v679
    %v683 = vmul.f32 %v663, %v582
    %v684 = vadd.f32 %v681, %v683
    %686 = vrot.lane.b32.xlu0 %v684, 96
    %v687 = vpop.permute.xlu0 %686
    %v688 = vsel %vm149, %v687, 0
    %690 = vmatprep.subr.mxu0 0.0
    %691 = vmatpush1.msra.mxu0 %v143
    %692 = vmatprep.subr.mxu0 0.0
    %693 = vmatpush1.msra.mxu0 %v144
    %694 = vmatprep.subr.mxu0 0.0
    %695 = vmatpush1.msra.mxu0 %v145
    %696 = vmatprep.subr.mxu0 0.0
    %697 = vmatpush1.msra.mxu0 %v146
    %698 = vmatprep.subr.mxu0 0.0
    %699 = vmatpush1.msra.mxu0 0.0
    %700 = vmatprep.subr.mxu0 0.0
    %701 = vmatpush1.msra.mxu0 0.0
    %702 = vmatprep.subr.mxu0 0.0
    %703 = vmatpush1.msra.mxu0 0.0
    %704 = vmatprep.subr.mxu0 0.0
    %705 = vmatpush1.msra.mxu0 0.0
    %706 = vmatprep.subr.mxu0 0.0
    %707 = vmatpush1.msra.mxu0 0.0
    %708 = vmatprep.subr.mxu0 0.0
    %709 = vmatpush1.msra.mxu0 0.0
    %710 = vmatprep.subr.mxu0 0.0
    %711 = vmatpush1.msra.mxu0 0.0
    %712 = vmatprep.subr.mxu0 0.0
    %713 = vmatpush1.msra.mxu0 0.0
    %714 = vmatprep.subr.mxu0 0.0
    %715 = vmatpush1.msra.mxu0 0.0
    %716 = vmatprep.subr.mxu0 0.0
    %717 = vmatpush1.msra.mxu0 0.0
    %718 = vmatprep.subr.mxu0 0.0
    %719 = vmatpush1.msra.mxu0 0.0
    %720 = vmatprep.subr.mxu0 0.0
    %721 = vmatpush1.msra.mxu0 0.0
    %722 = vmatprep.subr.mxu0 0.0
    %723 = vmatpush1.msra.mxu0 0.0
    %724 = vmatprep.subr.mxu0 0.0
    %725 = vmatpush1.msra.mxu0 0.0
    %726 = vmatprep.subr.mxu0 0.0
    %727 = vmatpush1.msra.mxu0 0.0
    %728 = vmatprep.subr.mxu0 0.0
    %729 = vmatpush1.msra.mxu0 0.0
    %730 = vmatprep.subr.mxu0 0.0
    %731 = vmatpush1.msra.mxu0 0.0
    %732 = vmatprep.subr.mxu0 0.0
    %733 = vmatpush1.msra.mxu0 0.0
    %734 = vmatprep.subr.mxu0 0.0
    %735 = vmatpush1.msra.mxu0 0.0
    %736 = vmatprep.subr.mxu0 0.0
    %737 = vmatpush1.msra.mxu0 0.0
    %738 = vmatprep.subr.mxu0 0.0
    %739 = vmatpush1.msra.mxu0 0.0
    %740 = vmatprep.subr.mxu0 0.0
    %741 = vmatpush1.msra.mxu0 0.0
    %742 = vmatprep.subr.mxu0 0.0
    %743 = vmatpush1.msra.mxu0 0.0
    %744 = vmatprep.subr.mxu0 0.0
    %745 = vmatpush1.msra.mxu0 0.0
    %746 = vmatprep.subr.mxu0 0.0
    %747 = vmatpush1.msra.mxu0 0.0
    %748 = vmatprep.subr.mxu0 0.0
    %749 = vmatpush1.msra.mxu0 0.0
    %750 = vmatprep.subr.mxu0 0.0
    %751 = vmatpush1.msra.mxu0 0.0
    %752 = vmatprep.subr.mxu0 0.0
    %753 = vmatpush1.msra.mxu0 0.0
    %754 = vmatprep.mubr.f32.mxu0 0.0
    %755 = vmatmul.mubr.f32.gmra.mrb[0].mxu0 %v688
    %v756 = vpop.f32.mrb[0].mxu0
    %v757 = vadd.f32 0.0, %v756
    %v758 = vpop.f32.mrb[0].mxu0
    %759 = vdwg.mxu0
    %v761 = vrot.slane %v757, 4
    %v763 = vadd.f32 %v135, %v761
    %v764 = vxor.u32 %v763, 2147483648
    %v765 = vmul.f32 %v764, 1.442695
    %v766 = vpow.pop %v765
    %v767 = vadd.f32 %v766, 1.0
    %v768 = vrcp.pop %v767
    %v769 = vmul.f32 1.0, %v768
    %v770 = vadd.f32 %v757, %v236
    %v772 = vrot.slane %v770, 4
    %773 = vrot.lane.b32.xlu0 %v772, 64
    %v774 = vpop.permute.xlu0 %773
    %v776 = vmul.f32 %v769, %v774
    %778 = vrot.lane.b32.xlu0 %v776, 64
    %v779 = vpop.permute.xlu0 %778
    %v781 = vadd.f32 %v135, %v779
    %v782 = vtanh.pop %v781
    %v783 = vsub.f32 1.0, %v769
    %785 = vrot.lane.b32.xlu0 %v782, 96
    %v786 = vpop.permute.xlu0 %785
    %v788 = vmul.f32 %v783, %v786
    %v789 = vrot.slane %v684, 4
    %v791 = vmul.f32 %v769, %v789
    %v792 = vadd.f32 %v788, %v791
    %v794 = vrot.slane %v792, 4
    %795 = vrot.lane.b32.xlu0 %v794, 96
    %v796 = vpop.permute.xlu0 %795
    %v797 = vsel %vm149, %v796, 0
    %799 = vmatprep.subr.mxu0 0.0
    %800 = vmatpush1.msra.mxu0 %v143
    %801 = vmatprep.subr.mxu0 0.0
    %802 = vmatpush1.msra.mxu0 %v144
    %803 = vmatprep.subr.mxu0 0.0
    %804 = vmatpush1.msra.mxu0 %v145
    %805 = vmatprep.subr.mxu0 0.0
    %806 = vmatpush1.msra.mxu0 %v146
    %807 = vmatprep.subr.mxu0 0.0
    %808 = vmatpush1.msra.mxu0 0.0
    %809 = vmatprep.subr.mxu0 0.0
    %810 = vmatpush1.msra.mxu0 0.0
    %811 = vmatprep.subr.mxu0 0.0
    %812 = vmatpush1.msra.mxu0 0.0
    %813 = vmatprep.subr.mxu0 0.0
    %814 = vmatpush1.msra.mxu0 0.0
    %815 = vmatprep.subr.mxu0 0.0
    %816 = vmatpush1.msra.mxu0 0.0
    %817 = vmatprep.subr.mxu0 0.0
    %818 = vmatpush1.msra.mxu0 0.0
    %819 = vmatprep.subr.mxu0 0.0
    %820 = vmatpush1.msra.mxu0 0.0
    %821 = vmatprep.subr.mxu0 0.0
    %822 = vmatpush1.msra.mxu0 0.0
    %823 = vmatprep.subr.mxu0 0.0
    %824 = vmatpush1.msra.mxu0 0.0
    %825 = vmatprep.subr.mxu0 0.0
    %826 = vmatpush1.msra.mxu0 0.0
    %827 = vmatprep.subr.mxu0 0.0
    %828 = vmatpush1.msra.mxu0 0.0
    %829 = vmatprep.subr.mxu0 0.0
    %830 = vmatpush1.msra.mxu0 0.0
    %831 = vmatprep.subr.mxu0 0.0
    %832 = vmatpush1.msra.mxu0 0.0
    %833 = vmatprep.subr.mxu0 0.0
    %834 = vmatpush1.msra.mxu0 0.0
    %835 = vmatprep.subr.mxu0 0.0
    %836 = vmatpush1.msra.mxu0 0.0
    %837 = vmatprep.subr.mxu0 0.0
    %838 = vmatpush1.msra.mxu0 0.0
    %839 = vmatprep.subr.mxu0 0.0
    %840 = vmatpush1.msra.mxu0 0.0
    %841 = vmatprep.subr.mxu0 0.0
    %842 = vmatpush1.msra.mxu0 0.0
    %843 = vmatprep.subr.mxu0 0.0
    %844 = vmatpush1.msra.mxu0 0.0
    %845 = vmatprep.subr.mxu0 0.0
    %846 = vmatpush1.msra.mxu0 0.0
    %847 = vmatprep.subr.mxu0 0.0
    %848 = vmatpush1.msra.mxu0 0.0
    %849 = vmatprep.subr.mxu0 0.0
    %850 = vmatpush1.msra.mxu0 0.0
    %851 = vmatprep.subr.mxu0 0.0
    %852 = vmatpush1.msra.mxu0 0.0
    %853 = vmatprep.subr.mxu0 0.0
    %854 = vmatpush1.msra.mxu0 0.0
    %855 = vmatprep.subr.mxu0 0.0
    %856 = vmatpush1.msra.mxu0 0.0
    %857 = vmatprep.subr.mxu0 0.0
    %858 = vmatpush1.msra.mxu0 0.0
    %859 = vmatprep.subr.mxu0 0.0
    %860 = vmatpush1.msra.mxu0 0.0
    %861 = vmatprep.subr.mxu0 0.0
    %862 = vmatpush1.msra.mxu0 0.0
    %863 = vmatprep.mubr.f32.mxu0 0.0
    %864 = vmatmul.mubr.f32.gmra.mrb[0].mxu0 %v797
    %v865 = vpop.f32.mrb[0].mxu0
    %v866 = vadd.f32 0.0, %v865
    %v867 = vpop.f32.mrb[0].mxu0
    %868 = vdwg.mxu0
    %v869 = vadd.f32 %v140, %v866
    %v870 = vxor.u32 %v869, 2147483648
    %v871 = vmul.f32 %v870, 1.442695
    %v872 = vpow.pop %v871
    %v873 = vadd.f32 %v872, 1.0
    %v874 = vrcp.pop %v873
    %v875 = vmul.f32 1.0, %v874
    %v876 = vadd.f32 %v866, %v236
    %878 = vrot.lane.b32.xlu0 %v876, 64
    %v879 = vpop.permute.xlu0 %878
    %v881 = vmul.f32 %v875, %v879
    %883 = vrot.lane.b32.xlu0 %v881, 64
    %v884 = vpop.permute.xlu0 %883
    %v886 = vadd.f32 %v140, %v884
    %v887 = vtanh.pop %v886
    %v888 = vsub.f32 1.0, %v875
    %890 = vrot.lane.b32.xlu0 %v887, 96
    %v891 = vpop.permute.xlu0 %890
    %v893 = vmul.f32 %v888, %v891
    %v895 = vmul.f32 %v875, %v794
    %v896 = vadd.f32 %v893, %v895
    %898 = vrot.lane.b32.xlu0 %v896, 96
    %v899 = vpop.permute.xlu0 %898
    %v900 = vsel %vm149, %v899, 0
    %902 = vmatprep.subr.mxu0 0.0
    %903 = vmatpush1.msra.mxu0 %v143
    %904 = vmatprep.subr.mxu0 0.0
    %905 = vmatpush1.msra.mxu0 %v144
    %906 = vmatprep.subr.mxu0 0.0
    %907 = vmatpush1.msra.mxu0 %v145
    %908 = vmatprep.subr.mxu0 0.0
    %909 = vmatpush1.msra.mxu0 %v146
    %910 = vmatprep.subr.mxu0 0.0
    %911 = vmatpush1.msra.mxu0 0.0
    %912 = vmatprep.subr.mxu0 0.0
    %913 = vmatpush1.msra.mxu0 0.0
    %914 = vmatprep.subr.mxu0 0.0
    %915 = vmatpush1.msra.mxu0 0.0
    %916 = vmatprep.subr.mxu0 0.0
    %917 = vmatpush1.msra.mxu0 0.0
    %918 = vmatprep.subr.mxu0 0.0
    %919 = vmatpush1.msra.mxu0 0.0
    %920 = vmatprep.subr.mxu0 0.0
    %921 = vmatpush1.msra.mxu0 0.0
    %922 = vmatprep.subr.mxu0 0.0
    %923 = vmatpush1.msra.mxu0 0.0
    %924 = vmatprep.subr.mxu0 0.0
    %925 = vmatpush1.msra.mxu0 0.0
    %926 = vmatprep.subr.mxu0 0.0
    %927 = vmatpush1.msra.mxu0 0.0
    %928 = vmatprep.subr.mxu0 0.0
    %929 = vmatpush1.msra.mxu0 0.0
    %930 = vmatprep.subr.mxu0 0.0
    %931 = vmatpush1.msra.mxu0 0.0
    %932 = vmatprep.subr.mxu0 0.0
    %933 = vmatpush1.msra.mxu0 0.0
    %934 = vmatprep.subr.mxu0 0.0
    %935 = vmatpush1.msra.mxu0 0.0
    %936 = vmatprep.subr.mxu0 0.0
    %937 = vmatpush1.msra.mxu0 0.0
    %938 = vmatprep.subr.mxu0 0.0
    %939 = vmatpush1.msra.mxu0 0.0
    %940 = vmatprep.subr.mxu0 0.0
    %941 = vmatpush1.msra.mxu0 0.0
    %942 = vmatprep.subr.mxu0 0.0
    %943 = vmatpush1.msra.mxu0 0.0
    %944 = vmatprep.subr.mxu0 0.0
    %945 = vmatpush1.msra.mxu0 0.0
    %946 = vmatprep.subr.mxu0 0.0
    %947 = vmatpush1.msra.mxu0 0.0
    %948 = vmatprep.subr.mxu0 0.0
    %949 = vmatpush1.msra.mxu0 0.0
    %950 = vmatprep.subr.mxu0 0.0
    %951 = vmatpush1.msra.mxu0 0.0
    %952 = vmatprep.subr.mxu0 0.0
    %953 = vmatpush1.msra.mxu0 0.0
    %954 = vmatprep.subr.mxu0 0.0
    %955 = vmatpush1.msra.mxu0 0.0
    %956 = vmatprep.subr.mxu0 0.0
    %957 = vmatpush1.msra.mxu0 0.0
    %958 = vmatprep.subr.mxu0 0.0
    %959 = vmatpush1.msra.mxu0 0.0
    %960 = vmatprep.subr.mxu0 0.0
    %961 = vmatpush1.msra.mxu0 0.0
    %962 = vmatprep.subr.mxu0 0.0
    %963 = vmatpush1.msra.mxu0 0.0
    %964 = vmatprep.subr.mxu0 0.0
    %965 = vmatpush1.msra.mxu0 0.0
    %966 = vmatprep.mubr.f32.mxu0 0.0
    %967 = vmatmul.mubr.f32.gmra.mrb[0].mxu0 %v900
    %v968 = vpop.f32.mrb[0].mxu0
    %v969 = vadd.f32 0.0, %v968
    %v970 = vpop.f32.mrb[0].mxu0
    %971 = vdwg.mxu0
    %v973 = vrot.slane %v969, 4
    %v975 = vadd.f32 %v140, %v973
    %v976 = vxor.u32 %v975, 2147483648
    %v977 = vmul.f32 %v976, 1.442695
    %v978 = vpow.pop %v977
    %v979 = vadd.f32 %v978, 1.0
    %v980 = vrcp.pop %v979
    %v981 = vmul.f32 1.0, %v980
    %v982 = vadd.f32 %v969, %v236
    %v984 = vrot.slane %v982, 4
    %985 = vrot.lane.b32.xlu0 %v984, 64
    %v986 = vpop.permute.xlu0 %985
    %v988 = vmul.f32 %v981, %v986
    %990 = vrot.lane.b32.xlu0 %v988, 64
    %v991 = vpop.permute.xlu0 %990
    %v993 = vadd.f32 %v140, %v991
    %v994 = vtanh.pop %v993
    %v995 = vsub.f32 1.0, %v981
    %997 = vrot.lane.b32.xlu0 %v994, 96
    %v998 = vpop.permute.xlu0 %997
    %v1000 = vmul.f32 %v995, %v998
    %v1001 = vrot.slane %v896, 4
    %v1003 = vmul.f32 %v981, %v1001
    %v1004 = vadd.f32 %v1000, %v1003
    %vm1005 = vcmask 1043456
    %v1006 = vsel %vm1005, %v260, %v368
    %v1007 = vsel %vm1005, %v472, %v580
    %v1008 = vsel %vm1005, %v684, %v792
    %v1009 = vsel %vm1005, %v896, %v1004
    %v1010 = vmax.f32 %v1006, 0.0
    %v1011 = vmax.f32 %v1007, 0.0
    %v1012 = vmax.f32 %v1008, 0.0
    %v1013 = vmax.f32 %v1009, 0.0
    %v1014 = vld [vmem:[%s6] sm:$0xff]
    %v1015 = vld [vmem:[%s6 + $0x8] sm:$0xff]
    %v1016 = vld [vmem:[%s6 + $0x10] sm:$0xff]
    %v1017 = vld [vmem:[%s6 + $0x18] sm:$0xff]
    %v1018 = vld [vmem:[%s7] sm:$0x1]
    %v1020 = vlaneseq
    %v1021 = vshrl.u32 %v1020, 7
    %v1022 = vsub.s32 0, %v1021
    %v1023 = vrot.slane %v1018, %v1022
    %1029 = vrot.lane.b32.xlu0 %v1010, 96
    %v1030 = vpop.permute.xlu0 %1029
    %1031 = vrot.lane.b32.xlu0 %v1011, 96
    %v1032 = vpop.permute.xlu0 %1031
    %1033 = vrot.lane.b32.xlu0 %v1012, 96
    %v1034 = vpop.permute.xlu0 %1033
    %1035 = vrot.lane.b32.xlu0 %v1013, 96
    %v1036 = vpop.permute.xlu0 %1035
    %v1037 = vsel %vm149, %v1030, 0
    %v1039 = vsel %vm149, %v1032, 0
    %v1041 = vsel %vm149, %v1034, 0
    %v1043 = vsel %vm149, %v1036, 0
    %1045 = vmatprep.subr.mxu0 0.0
    %1046 = vmatpush1.msra.mxu0 %v1014
    %1047 = vmatprep.subr.mxu0 0.0
    %1048 = vmatpush1.msra.mxu0 %v1015
    %1049 = vmatprep.subr.mxu0 0.0
    %1050 = vmatpush1.msra.mxu0 %v1016
    %1051 = vmatprep.subr.mxu0 0.0
    %1052 = vmatpush1.msra.mxu0 %v1017
    %1053 = vmatprep.subr.mxu0 0.0
    %1054 = vmatpush1.msra.mxu0 0.0
    %1055 = vmatprep.subr.mxu0 0.0
    %1056 = vmatpush1.msra.mxu0 0.0
    %1057 = vmatprep.subr.mxu0 0.0
    %1058 = vmatpush1.msra.mxu0 0.0
    %1059 = vmatprep.subr.mxu0 0.0
    %1060 = vmatpush1.msra.mxu0 0.0
    %1061 = vmatprep.subr.mxu0 0.0
    %1062 = vmatpush1.msra.mxu0 0.0
    %1063 = vmatprep.subr.mxu0 0.0
    %1064 = vmatpush1.msra.mxu0 0.0
    %1065 = vmatprep.subr.mxu0 0.0
    %1066 = vmatpush1.msra.mxu0 0.0
    %1067 = vmatprep.subr.mxu0 0.0
    %1068 = vmatpush1.msra.mxu0 0.0
    %1069 = vmatprep.subr.mxu0 0.0
    %1070 = vmatpush1.msra.mxu0 0.0
    %1071 = vmatprep.subr.mxu0 0.0
    %1072 = vmatpush1.msra.mxu0 0.0
    %1073 = vmatprep.subr.mxu0 0.0
    %1074 = vmatpush1.msra.mxu0 0.0
    %1075 = vmatprep.subr.mxu0 0.0
    %1076 = vmatpush1.msra.mxu0 0.0
    %1077 = vmatprep.subr.mxu0 0.0
    %1078 = vmatpush1.msra.mxu0 0.0
    %1079 = vmatprep.subr.mxu0 0.0
    %1080 = vmatpush1.msra.mxu0 0.0
    %1081 = vmatprep.subr.mxu0 0.0
    %1082 = vmatpush1.msra.mxu0 0.0
    %1083 = vmatprep.subr.mxu0 0.0
    %1084 = vmatpush1.msra.mxu0 0.0
    %1085 = vmatprep.subr.mxu0 0.0
    %1086 = vmatpush1.msra.mxu0 0.0
    %1087 = vmatprep.subr.mxu0 0.0
    %1088 = vmatpush1.msra.mxu0 0.0
    %1089 = vmatprep.subr.mxu0 0.0
    %1090 = vmatpush1.msra.mxu0 0.0
    %1091 = vmatprep.subr.mxu0 0.0
    %1092 = vmatpush1.msra.mxu0 0.0
    %1093 = vmatprep.subr.mxu0 0.0
    %1094 = vmatpush1.msra.mxu0 0.0
    %1095 = vmatprep.subr.mxu0 0.0
    %1096 = vmatpush1.msra.mxu0 0.0
    %1097 = vmatprep.subr.mxu0 0.0
    %1098 = vmatpush1.msra.mxu0 0.0
    %1099 = vmatprep.subr.mxu0 0.0
    %1100 = vmatpush1.msra.mxu0 0.0
    %1101 = vmatprep.subr.mxu0 0.0
    %1102 = vmatpush1.msra.mxu0 0.0
    %1103 = vmatprep.subr.mxu0 0.0
    %1104 = vmatpush1.msra.mxu0 0.0
    %1105 = vmatprep.subr.mxu0 0.0
    %1106 = vmatpush1.msra.mxu0 0.0
    %1107 = vmatprep.subr.mxu0 0.0
    %1108 = vmatpush1.msra.mxu0 0.0
    %1109 = vmatprep.mubr.f32.mxu0 0.0
    %1110 = vmatmul.mubr.f32.gmra.mrb[0].mxu0 %v1037
    %v1111 = vpop.f32.mrb[0].mxu0
    %v1112 = vadd.f32 %v1023, %v1111
    %v1113 = vpop.f32.mrb[0].mxu0
    %1114 = vmatprep.mubr.f32.mxu0 0.0
    %1115 = vmatmul.mubr.f32.gmra.mrb[0].mxu0 %v1039
    %v1116 = vpop.f32.mrb[0].mxu0
    %v1117 = vadd.f32 %v1023, %v1116
    %v1118 = vpop.f32.mrb[0].mxu0
    %1119 = vmatprep.mubr.f32.mxu0 0.0
    %1120 = vmatmul.mubr.f32.gmra.mrb[0].mxu0 %v1041
    %v1121 = vpop.f32.mrb[0].mxu0
    %v1122 = vadd.f32 %v1023, %v1121
    %v1123 = vpop.f32.mrb[0].mxu0
    %1124 = vmatprep.mubr.f32.mxu0 0.0
    %1125 = vmatmul.mubr.f32.gmra.mrb[0].mxu0 %v1043
    %v1126 = vpop.f32.mrb[0].mxu0
    %v1127 = vadd.f32 %v1023, %v1126
    %v1128 = vpop.f32.mrb[0].mxu0
    %1129 = vdwg.mxu0
    %vm1130 = vcmask 48128
    %1131 = vst.msk [vmem:[%s8] sm:$0xff] %vm1130, %v1112
    %1132 = vst.msk [vmem:[%s8 + $0x8] sm:$0xff] %vm1130, %v1117
    %1133 = vst.msk [vmem:[%s8 + $0x10] sm:$0xff] %vm1130, %v1122
    %1134 = vst.msk [vmem:[%s8 + $0x18] sm:$0xff] %vm1130, %v1127
    %1136 = vrot.lane.b32.xlu0 %v1004, 96
    %v1137 = vpop.permute.xlu0 %1136
    %vm1139 = vcmask 261124
    %1140 = vst.msk [vmem:[#allocation2 - $0x4] sm:$0xf0] %vm1139, %v1137
    // Predicated region
    $region34: #{tpu_custom_call.1} parent=1 // pred_check
      _
    $region35: #{tpu_custom_call.1} parent=1 // pred_check_branch
      %1142 = sbr.rel (0) target = $region37
    $region36: #{tpu_custom_call.1} parent=1 // pred_region
      _
    $region37: #{tpu_custom_call.1} parent=1 // pred_fallthru
      _
    // Predicated region
    $region38: #{tpu_custom_call.1} parent=1 // pred_check
      _
    $region39: #{tpu_custom_call.1} parent=1 // pred_check_branch
      %1144 = sbr.rel (0) target = $region41
    $region40: #{tpu_custom_call.1} parent=1 // pred_region
      %s1146 = ssub.s32 64, 64
      %1147 = vsyncadd [#allocation3], %s1146
      %s1149 = sshll.u32 [#allocation2], 4
      %s1150 = int_to_ptr.vmem [resolvable:$true] %s1149
      %1152 = dma.vmem_to_hbm [thread:$0]  %s1150, 64, %s9, [#allocation3]
    $region41: #{tpu_custom_call.1} parent=1 // pred_fallthru
      _
    // Predicated region
    $region42: #{tpu_custom_call.1} parent=1 // pred_check
      _
    $region43: #{tpu_custom_call.1} parent=1 // pred_check_branch
      %1154 = sbr.rel (0) target = $region45
    $region44: #{tpu_custom_call.1} parent=1 // pred_region
      _
    $region45: #{tpu_custom_call.1} parent=1 // pred_fallthru
      _
    // Predicated region
    $region46: #{tpu_custom_call.1} parent=1 // pred_check
      _
    $region47: #{tpu_custom_call.1} parent=1 // pred_check_branch
      %1156 = sbr.rel (0) target = $region49
    $region48: #{tpu_custom_call.1} parent=1 // pred_region
      %1157 = dma.done [#allocation3], 64
    $region49: #{tpu_custom_call.1} parent=1 // pred_fallthru
      _
    %1158 = vsyncpa [#allocation3], 1

</llo_original>
